<compile_context>
chip_gen: v5e
topology: v5e:2x2
jax: 0.10.0
libtpu: 0.0.40
codegen_flags: <defaults>
</compile_context>

<pallas_src>
import functools

import jax
import jax.numpy as jnp
from jax import lax
from jax.experimental import pallas as pl
from jax.experimental.pallas import tpu as pltpu

CLASS_NUM = 62
BN_EPS = 1e-5
NORM_EPS = 1e-12

# static ResNet-18 layer config: (in_c, out_c, first-block stride)
LAYER_CFG = ((64, 64, 1), (64, 128, 2), (128, 256, 2), (256, 512, 2))

VMEM_LIMIT_BYTES = 32 << 20                 # safe scoped limit on v5e/v6e/v7x
_TILE_BUDGET = int(0.55 * VMEM_LIMIT_BYTES)  # budget for the streamed feature tiles


def _round_up(x, m):
    return (x + m - 1) // m * m


def _cdiv(a, b):
    return -(-a // b)


def _pick_batch_tile(B, tb_max=256):
    """Split B as evenly as possible into <=tb_max-row, sublane-aligned tiles.

    Guarantees >=2 tiles when B allows so both v7x TensorCores get work.
    """
    n_b = max(1, _cdiv(B, tb_max))
    if n_b == 1 and B >= 16:
        n_b = 2
    return _round_up(_cdiv(B, n_b), 8)


def _pick_tiles(B, HW, C=512):
    """Pick (TB, THW) so the double-buffered bf16 feature tile fits VMEM."""
    TB = _pick_batch_tile(B)

    def tile_bytes(tb, thw):
        # double-buffered bf16 tile; bf16 packs 16 rows per sublane group
        return 2 * tb * _round_up(thw, 16) * C * 2

    cands = [HW] + [c for c in (1024, 512, 256, 128, 64, 32, 16, 8)
                    if c < HW and HW % c == 0]
    THW = cands[-1]
    for c in cands:                       # largest chunk that fits the budget
        if tile_bytes(TB, c) <= _TILE_BUDGET:
            THW = c
            break
    while TB > 8 and tile_bytes(TB, THW) > _TILE_BUDGET:
        TB -= 8
    return TB, THW


# ----------------------------------------------------------------------------
# Pallas kernels: maxpool + fused(reduce 1x1 conv + BN) + L2-norm + fused 4x FC
# ----------------------------------------------------------------------------
def _head_compute(pooled_bf16, rw_ref, wall_ref, bias_ref, out_ref,
                  n_reduce, n_out_pad):
    biases = bias_ref[...]                                   # (2, Wb) f32
    rb = biases[0:1, :n_reduce]                              # fused reduce + BN bias
    ob = biases[1:2, :n_out_pad]                             # fused FC biases (lane-padded)

    # reduce_layer (1x1 conv == linear) with eval-mode BatchNorm1d folded in.
    feat = jnp.dot(pooled_bf16, rw_ref[...],
                   preferred_element_type=jnp.float32) + rb  # (TB, n_reduce)

    # F.normalize(feat, dim=1, p=2) == feat / max(||feat||, 1e-12)
    sumsq = jnp.sum(feat * feat, axis=1, keepdims=True)
    feat = feat * lax.rsqrt(jnp.maximum(sumsq, NORM_EPS * NORM_EPS))

    # 4 FC heads fused as one lane-dense matmul (output padded to 256 lanes)
    out_ref[...] = jnp.dot(feat.astype(jnp.bfloat16), wall_ref[...],
                           preferred_element_type=jnp.float32) + ob


def _head_kernel_pooled(f_ref, rw_ref, wall_ref, bias_ref, out_ref, *,
                        n_reduce, n_out_pad):
    # f_ref: (TB, 512) bf16, already max-pooled over spatial positions.
    _head_compute(f_ref[...], rw_ref, wall_ref, bias_ref, out_ref,
                  n_reduce, n_out_pad)


def _head_kernel_tiled(f_ref, rw_ref, wall_ref, bias_ref, out_ref, pool_ref, *,
                       n_reduce, n_out_pad):
    # f_ref: (TB, THW, 512) bf16; HW is the trailing "arbitrary" reduction axis.
    hw = pl.program_id(1)

    @pl.when(hw == 0)
    def _():
        pool_ref[...] = jnp.full(pool_ref.shape, -jnp.inf, pool_ref.dtype)

    tile_max = jnp.max(f_ref[...], axis=1).astype(jnp.float32)   # (TB, 512)
    pool_ref[...] = jnp.maximum(pool_ref[...], tile_max)

    @pl.when(hw == pl.num_programs(1) - 1)
    def _():
        _head_compute(pool_ref[...].astype(jnp.bfloat16),
                      rw_ref, wall_ref, bias_ref, out_ref, n_reduce, n_out_pad)


def bnneck_head(feat_map, head, class_num=CLASS_NUM):
    """feat_map: (B, H, W, 512) channels-last backbone output (f32)."""
    B, H, W, C = feat_map.shape
    HW = H * W
    n_reduce = head['rw'].shape[1]
    n_out_pad = head['wall'].shape[1]
    n_out = 4 * class_num

    # Weights / biases are grid-invariant (constant index_map), so Mosaic keeps
    # them resident instead of re-fetching per grid step.
    if HW < 16:
        # Tiny spatial maps: bf16 sublane padding of the (HW, C) tile would
        # dominate the DMA, so pool in the backbone epilogue (fused by XLA)
        # and stream only (B, 512) bf16 rows into the kernel.
        pooled = jnp.max(feat_map, axis=(1, 2)).astype(jnp.bfloat16)
        TB = _pick_batch_tile(B)
        B_pad = _round_up(B, TB)
        if B_pad != B:
            pooled = jnp.pad(pooled, ((0, B_pad - B), (0, 0)))
        grid = (B_pad // TB,)
        kernel = functools.partial(_head_kernel_pooled,
                                   n_reduce=n_reduce, n_out_pad=n_out_pad)
        in_specs = [
            pl.BlockSpec((TB, C), lambda i: (i, 0)),
            pl.BlockSpec(head['rw'].shape, lambda i: (0, 0)),
            pl.BlockSpec(head['wall'].shape, lambda i: (0, 0)),
            pl.BlockSpec(head['bias'].shape, lambda i: (0, 0)),
        ]
        out_spec = pl.BlockSpec((TB, n_out_pad), lambda i: (i, 0))
        scratch = []
        dims = ("parallel",)
        operands = (pooled,)
        f_bytes = pooled.size * pooled.dtype.itemsize
    else:
        TB, THW = _pick_tiles(B, HW, C)
        B_pad = _round_up(B, TB)
        # bf16 stream: halves the dominant HBM traffic (cast fuses into the
        # backbone epilogue).
        f = feat_map.astype(jnp.bfloat16).reshape(B, HW, C)
        if B_pad != B:
            f = jnp.pad(f, ((0, B_pad - B), (0, 0), (0, 0)))
        grid = (B_pad // TB, HW // THW)
        kernel = functools.partial(_head_kernel_tiled,
                                   n_reduce=n_reduce, n_out_pad=n_out_pad)
        in_specs = [
            pl.BlockSpec((TB, THW, C), lambda b, h: (b, h, 0)),
            pl.BlockSpec(head['rw'].shape, lambda b, h: (0, 0)),
            pl.BlockSpec(head['wall'].shape, lambda b, h: (0, 0)),
            pl.BlockSpec(head['bias'].shape, lambda b, h: (0, 0)),
        ]
        out_spec = pl.BlockSpec((TB, n_out_pad), lambda b, h: (b, 0))
        scratch = [pltpu.VMEM((TB, C), jnp.float32)]   # running spatial max
        dims = ("parallel", "arbitrary")
        operands = (f,)
        f_bytes = f.size * f.dtype.itemsize

    w_bytes = (head['rw'].size + head['wall'].size) * 2 + head['bias'].size * 4
    cost = pl.CostEstimate(
        flops=2 * B_pad * (C * n_reduce + n_reduce * n_out_pad),
        transcendentals=B_pad,
        bytes_accessed=int(f_bytes + w_bytes + B_pad * n_out_pad * 4))

    out = pl.pallas_call(
        kernel,
        out_shape=jax.ShapeDtypeStruct((B_pad, n_out_pad), jnp.float32),
        grid=grid,
        in_specs=in_specs,
        out_specs=out_spec,
        scratch_shapes=scratch,
        compiler_params=pltpu.CompilerParams(
            dimension_semantics=dims,
            vmem_limit_bytes=VMEM_LIMIT_BYTES),
        cost_estimate=cost,
    )(*operands, head['rw'], head['wall'], head['bias'])

    out = out[:B, :n_out]
    return tuple(out[:, k * class_num:(k + 1) * class_num] for k in range(4))


# ----------------------------------------------------------------------------
# Plain-JAX glue: ResNet-18 backbone, channels-last (NHWC)
# TODO(synk): backbone convs kept in plain JAX (lax.conv) rather than Pallas.
# ----------------------------------------------------------------------------
def _conv2d(x, w, stride=1, padding=0):
    return lax.conv_general_dilated(
        x, w, (stride, stride), [(padding, padding), (padding, padding)],
        dimension_numbers=('NHWC', 'HWIO', 'NHWC'))


def _bn2d(x, p, eps=BN_EPS):
    g = p['gamma'][None, None, None, :]
    b = p['beta'][None, None, None, :]
    m = p['mean'][None, None, None, :]
    v = p['var'][None, None, None, :]
    return (x - m) * lax.rsqrt(v + eps) * g + b


def _basic_block(x, blk, stride):
    out = _conv2d(x, blk['conv1'], stride=stride, padding=1)
    out = jax.nn.relu(_bn2d(out, blk['bn1']))
    out = _conv2d(out, blk['conv2'], stride=1, padding=1)
    out = _bn2d(out, blk['bn2'])
    if 'down_conv' in blk:
        idn = _bn2d(_conv2d(x, blk['down_conv'], stride=stride, padding=0),
                    blk['down_bn'])
    else:
        idn = x
    return jax.nn.relu(out + idn)


def backbone(x, p):
    """x: (B, H, W, 3) NHWC -> (B, H/16, W/16, 512) NHWC."""
    x = _conv2d(x, p['conv1'], stride=2, padding=3)
    x = jax.nn.relu(_bn2d(x, p['bn1']))
    for blocks, (_, _, lstride) in zip(p['layers'], LAYER_CFG):
        for bi, blk in enumerate(blocks):
            x = _basic_block(x, blk, lstride if bi == 0 else 1)
    return x


def bnneck_forward(x, prepared, class_num=CLASS_NUM):
    """x: (B, 3, H, W) NCHW (PyTorch layout)."""
    x = jnp.transpose(x, (0, 2, 3, 1))        # tiny 3-channel transpose only
    feat_map = backbone(x, prepared['backbone'])
    return bnneck_head(feat_map, prepared['head'], class_num)


# ----------------------------------------------------------------------------
# Deterministic parameter construction (shapes per bnneck.__init__)
# ----------------------------------------------------------------------------
def _bn_params(c):
    return dict(gamma=jnp.ones((c,), jnp.float32),
                beta=jnp.zeros((c,), jnp.float32),
                mean=jnp.zeros((c,), jnp.float32),
                var=jnp.ones((c,), jnp.float32))


def make_params(key, class_num=CLASS_NUM):
    keys = iter(jax.random.split(key, 64))

    def rnd(shape, scale=0.05):
        return jax.random.normal(next(keys), shape, jnp.float32) * scale

    p = {}
    p['conv1'] = rnd((64, 3, 7, 7))           # OIHW (PyTorch layout)
    p['bn1'] = _bn_params(64)
    p['layers'] = []
    for in_c, out_c, stride in LAYER_CFG:
        blocks = []
        for bi in range(2):
            s = stride if bi == 0 else 1
            ic = in_c if bi == 0 else out_c
            blk = {'conv1': rnd((out_c, ic, 3, 3)), 'bn1': _bn_params(out_c),
                   'conv2': rnd((out_c, out_c, 3, 3)), 'bn2': _bn_params(out_c)}
            if s != 1 or ic != out_c:
                blk['down_conv'] = rnd((out_c, ic, 1, 1))
                blk['down_bn'] = _bn_params(out_c)
            blocks.append(blk)
        p['layers'].append(blocks)

    # head: Conv2d(512,256,1), BatchNorm1d(256), 4x Linear(256, class_num)
    p['reduce_w'] = rnd((256, 512))
    p['reduce_b'] = rnd((256,))
    p['bnneck'] = _bn_params(256)
    p['fc_w'] = [rnd((class_num, 256)) for _ in range(4)]
    p['fc_b'] = [rnd((class_num,)) for _ in range(4)]
    return p


def prepare_params(p, class_num=CLASS_NUM):
    """One-time fusion / layout pass (run once, outside the per-call path)."""
    def hwio(w):                               # OIHW -> HWIO for NHWC convs
        return jnp.transpose(w, (2, 3, 1, 0))

    bb = {'conv1': hwio(p['conv1']), 'bn1': p['bn1'], 'layers': []}
    for blocks in p['layers']:
        nbs = []
        for blk in blocks:
            nb = {'conv1': hwio(blk['conv1']), 'bn1': blk['bn1'],
                  'conv2': hwio(blk['conv2']), 'bn2': blk['bn2']}
            if 'down_conv' in blk:
                nb['down_conv'] = hwio(blk['down_conv'])
                nb['down_bn'] = blk['down_bn']
            nbs.append(nb)
        bb['layers'].append(nbs)

    # Fold eval-mode BatchNorm1d into the 1x1 reduce conv.
    bn = p['bnneck']
    scale = bn['gamma'] * lax.rsqrt(bn['var'] + BN_EPS)                  # (256,)
    rw = p['reduce_w'].T * scale[None, :]                                # (512, 256)
    rb = (p['reduce_b'] - bn['mean']) * scale + bn['beta']               # (256,)
    n_reduce = rw.shape[1]

    # Fuse the 4 FC heads and lane-pad the output dim to a multiple of 128.
    n_out = 4 * class_num
    n_out_pad = _round_up(n_out, 128)
    wall = jnp.pad(jnp.concatenate([w.T for w in p['fc_w']], axis=1),
                   ((0, 0), (0, n_out_pad - n_out)))                     # (256, n_out_pad)
    ball = jnp.pad(jnp.concatenate(p['fc_b']), ((0, n_out_pad - n_out),))

    wb = _round_up(max(n_reduce, n_out_pad), 128)
    bias = jnp.stack([jnp.pad(rb, (0, wb - rb.shape[0])),
                      jnp.pad(ball, (0, wb - ball.shape[0]))], axis=0)   # (2, wb)

    head = {'rw': rw.astype(jnp.bfloat16),
            'wall': wall.astype(jnp.bfloat16),
            'bias': bias.astype(jnp.float32)}
    return {'backbone': bb, 'head': head}


# ----------------------------------------------------------------------------
# Pure-JAX references for the head (correctness checks only)
# ----------------------------------------------------------------------------
def _head_ref_f32(feat_map, p):
    """Original module math in f32 (eval-mode BN, L2 normalize, 4 FCs)."""
    pooled = jnp.max(feat_map, axis=(1, 2))                              # (B, 512)
    x = pooled @ p['reduce_w'].T + p['reduce_b']
    bn = p['bnneck']
    feat = (x - bn['mean']) * lax.rsqrt(bn['var'] + BN_EPS) * bn['gamma'] + bn['beta']
    nrm = jnp.sqrt(jnp.sum(feat * feat, axis=1, keepdims=True))
    feat = feat / jnp.maximum(nrm, NORM_EPS)
    return tuple(feat @ w.T + b for w, b in zip(p['fc_w'], p['fc_b']))


def _head_ref_fused(feat_map, head, class_num=CLASS_NUM):
    """Mirrors the kernel's fused / bf16-operand math exactly."""
    n_reduce = head['rw'].shape[1]
    n_out_pad = head['wall'].shape[1]
    pooled = jnp.max(feat_map, axis=(1, 2)).astype(jnp.bfloat16)
    rb = head['bias'][0:1, :n_reduce]
    ob = head['bias'][1:2, :n_out_pad]
    feat = jnp.dot(pooled, head['rw'], preferred_element_type=jnp.float32) + rb
    sumsq = jnp.sum(feat * feat, axis=1, keepdims=True)
    feat = feat * lax.rsqrt(jnp.maximum(sumsq, NORM_EPS * NORM_EPS))
    out = jnp.dot(feat.astype(jnp.bfloat16), head['wall'],
                  preferred_element_type=jnp.float32) + ob
    return tuple(out[:, k * class_num:(k + 1) * class_num] for k in range(4))


if __name__ == "__main__":
    key = jax.random.PRNGKey(0)
    k_param, k_input, k_feat = jax.random.split(key, 3)

    params = make_params(k_param)
    prepared = prepare_params(params)                 # one-time fused weights
    x = jax.random.normal(k_input, (2, 3, 32, 32), jnp.float32)   # NCHW input

    outs = jax.block_until_ready(jax.jit(bnneck_forward)(x, prepared))
    for o in outs:
        assert o.shape == (2, CLASS_NUM)
        assert bool(jnp.all(jnp.isfinite(o)))

    # Correctness of the Pallas head (pre-pooled path: HW=4) on the same feature map.
    feat_map = jax.jit(
        lambda a, bp: backbone(jnp.transpose(a, (0, 2, 3, 1)), bp)
    )(x, prepared['backbone'])
    kouts = jax.block_until_ready(jax.jit(bnneck_head)(feat_map, prepared['head']))

    fused_refs = _head_ref_fused(feat_map, prepared['head'])
    f32_refs = _head_ref_f32(feat_map, params)
    for ko, fr, rr in zip(kouts, fused_refs, f32_refs):
        # Tight: kernel vs identical fused/bf16-operand math.
        assert jnp.allclose(ko, fr, rtol=1e-3, atol=1e-3), "mismatch vs fused reference"
        # Loose: bf16 MXU operands vs original f32 module semantics.
        assert jnp.allclose(ko, rr, rtol=2e-2, atol=2e-2), "mismatch vs f32 reference"

    # Exercise the HW-tiled (in-kernel pooling) path with a larger spatial map
    # and a non-multiple-of-8 batch (tests batch padding + running-max scratch).
    feat_map2 = jax.random.normal(k_feat, (10, 4, 4, 512), jnp.float32)
    kouts2 = jax.block_until_ready(jax.jit(bnneck_head)(feat_map2, prepared['head']))
    fused2 = _head_ref_fused(feat_map2, prepared['head'])
    for ko, fr in zip(kouts2, fused2):
        assert ko.shape == (10, CLASS_NUM)
        assert bool(jnp.all(jnp.isfinite(ko)))
        assert jnp.allclose(ko, fr, rtol=1e-3, atol=1e-3), "mismatch vs fused reference (tiled)"

    print("KERNEL_OK")
</pallas_src>

<mosaic_0001>
module attributes {stable_mosaic.version = 11 : i64} {
  func.func @_head_kernel_pooled(%arg0: i32, %arg1: memref<8x512xbf16, #tpu.memory_space<vmem>>, %arg2: memref<512x256xbf16, #tpu.memory_space<vmem>>, %arg3: memref<256x256xbf16, #tpu.memory_space<vmem>>, %arg4: memref<2x256xf32, #tpu.memory_space<vmem>>, %arg5: memref<8x256xf32, #tpu.memory_space<vmem>>) attributes {dimension_semantics = [#tpu.dimension_semantics<parallel>], iteration_bounds = array<i64: 1>, scalar_prefetch = 0 : i64, scratch_operands = 0 : i64, tpu.core_type = #tpu.core_type<tc>, window_params = [{transform_indices = @transform_0, window_bounds = array<i64: 8, 512>}, {pipeline_mode = #tpu.pipeline_mode<synchronous>, transform_indices = @transform_1, window_bounds = array<i64: 512, 256>}, {pipeline_mode = #tpu.pipeline_mode<synchronous>, transform_indices = @transform_2, window_bounds = array<i64: 256, 256>}, {pipeline_mode = #tpu.pipeline_mode<synchronous>, transform_indices = @transform_3, window_bounds = array<i64: 2, 256>}, {transform_indices = @transform_4, window_bounds = array<i64: 8, 256>}]} {
    %c0 = arith.constant 0 : index
    %c0_0 = arith.constant 0 : index
    %0 = vector.load %arg1[%c0, %c0_0] : memref<8x512xbf16, #tpu.memory_space<vmem>>, vector<8x512xbf16>
    %c0_1 = arith.constant 0 : index
    %c0_2 = arith.constant 0 : index
    %1 = vector.load %arg4[%c0_1, %c0_2] : memref<2x256xf32, #tpu.memory_space<vmem>>, vector<2x256xf32>
    %2 = vector.extract_strided_slice %1 {offsets = [0, 0], sizes = [1, 256], strides = [1, 1]} : vector<2x256xf32> to vector<1x256xf32>
    %3 = vector.extract_strided_slice %1 {offsets = [1, 0], sizes = [1, 256], strides = [1, 1]} : vector<2x256xf32> to vector<1x256xf32>
    %c0_3 = arith.constant 0 : index
    %c0_4 = arith.constant 0 : index
    %4 = vector.load %arg2[%c0_3, %c0_4] : memref<512x256xbf16, #tpu.memory_space<vmem>>, vector<512x256xbf16>
    %cst = arith.constant dense<0.000000e+00> : vector<8x256xf32>
    %5 = tpu.matmul %0, %4, %cst {dimension_numbers = #tpu.dot_dimension_numbers<[1], [0], [0], [1], [0, 0, 1, 1], [], []>} : vector<8x512xbf16>, vector<512x256xbf16>, vector<8x256xf32> -> vector<8x256xf32>
    %6 = vector.broadcast %2 : vector<1x256xf32> to vector<8x256xf32>
    %7 = arith.addf %5, %6 : vector<8x256xf32>
    %8 = arith.mulf %7, %7 : vector<8x256xf32>
    %cst_5 = arith.constant dense<0.000000e+00> : vector<8xf32>
    %9 = vector.multi_reduction <add>, %8, %cst_5 [1] : vector<8x256xf32> to vector<8xf32>
    %10 = vector.shape_cast %9 : vector<8xf32> to vector<8x1xf32>
    %cst_6 = arith.constant 1.000000e-24 : f32
    %11 = vector.broadcast %cst_6 : f32 to vector<8x1xf32>
    %12 = arith.maximumf %10, %11 : vector<8x1xf32>
    %13 = math.rsqrt %12 : vector<8x1xf32>
    %14 = vector.broadcast %13 : vector<8x1xf32> to vector<8x256xf32>
    %15 = arith.mulf %7, %14 : vector<8x256xf32>
    %16 = arith.truncf %15 : vector<8x256xf32> to vector<8x256xbf16>
    %c0_7 = arith.constant 0 : index
    %c0_8 = arith.constant 0 : index
    %17 = vector.load %arg3[%c0_7, %c0_8] : memref<256x256xbf16, #tpu.memory_space<vmem>>, vector<256x256xbf16>
    %cst_9 = arith.constant dense<0.000000e+00> : vector<8x256xf32>
    %18 = tpu.matmul %16, %17, %cst_9 {dimension_numbers = #tpu.dot_dimension_numbers<[1], [0], [0], [1], [0, 0, 1, 1], [], []>} : vector<8x256xbf16>, vector<256x256xbf16>, vector<8x256xf32> -> vector<8x256xf32>
    %19 = vector.broadcast %3 : vector<1x256xf32> to vector<8x256xf32>
    %20 = arith.addf %18, %19 : vector<8x256xf32>
    %c0_10 = arith.constant 0 : index
    %c0_11 = arith.constant 0 : index
    %21 = vector.load %arg5[%c0_10, %c0_11] : memref<8x256xf32, #tpu.memory_space<vmem>>, vector<8x256xf32>
    tpu.vector_store %arg5[%c0_10, %c0_11], %20 {strides = array<i32>} : memref<8x256xf32, #tpu.memory_space<vmem>>, vector<8x256xf32>,
    return
  }
  func.func @transform_0(%arg0: i32) -> (i32, i32) {
    %c0_i32 = arith.constant 0 : i32
    %c0_i32_0 = arith.constant 0 : i32
    return %arg0, %c0_i32 : i32, i32
  }
  func.func @transform_1(%arg0: i32) -> (i32, i32) {
    %c0_i32 = arith.constant 0 : i32
    %c0_i32_0 = arith.constant 0 : i32
    %c0_i32_1 = arith.constant 0 : i32
    return %c0_i32, %c0_i32_0 : i32, i32
  }
  func.func @transform_2(%arg0: i32) -> (i32, i32) {
    %c0_i32 = arith.constant 0 : i32
    %c0_i32_0 = arith.constant 0 : i32
    %c0_i32_1 = arith.constant 0 : i32
    return %c0_i32, %c0_i32_0 : i32, i32
  }
  func.func @transform_3(%arg0: i32) -> (i32, i32) {
    %c0_i32 = arith.constant 0 : i32
    %c0_i32_0 = arith.constant 0 : i32
    %c0_i32_1 = arith.constant 0 : i32
    return %c0_i32, %c0_i32_0 : i32, i32
  }
  func.func @transform_4(%arg0: i32) -> (i32, i32) {
    %c0_i32 = arith.constant 0 : i32
    %c0_i32_0 = arith.constant 0 : i32
    return %arg0, %c0_i32 : i32, i32
  }
}

</mosaic_0001>

<llo_original>
// kernel: reverse
$region0: #{reverse}
  #allocation0 [shape = 's32[1]{0}', space=sflag, size = 0x4, scoped, tag = 'scoped memory for reverse']
  %s0 = inlined_call_operand.vmem [shape: f32[3,3,512,512], index: 0, kind: input, shape index: {}]
  %s1 = inlined_call_operand.vmem [shape: bf16[3,3,512,512], index: 1, kind: output, shape index: {}]
  loop: start=0, step=1, limit=28
  $region2: #{reverse} parent=0 // loop_pre_header
    _
  $region3: #{reverse} parent=0 // loop_header
    %s3 = sphi 0, %s7
    %p4 = scmp.ge.s32.totalorder %s3, 28
    %s18 = sphi 0, %s76
    %s19 = sphi 0, %s72
    %s20 = sphi 0, %s68
    %s21 = sphi 0, %s64
    %s22 = sphi 0, %s18
    %s23 = sphi 0, %s19
    %s24 = sphi 0, %s20
    %s25 = sphi 0, %s21
    %s26 = sphi 0, %s22
    %s27 = sphi 0, %s23
    %s28 = sphi 0, %s24
    %s29 = sphi 0, %s25
    %s30 = sphi 0, %s26
    %s31 = sphi 0, %s27
    %s32 = sphi 0, %s28
    %s33 = sphi 0, %s29
    %s34 = sphi 0, %s30
    %s35 = sphi 0, %s31
    %s36 = sphi 0, %s32
    %s37 = sphi 0, %s33
    %s38 = sphi 0, %s34
    %s39 = sphi 0, %s35
    %s40 = sphi 0, %s36
    %s41 = sphi 0, %s37
    %s42 = sphi 0, %s38
    %s43 = sphi 0, %s39
    %s44 = sphi 0, %s40
    %s45 = sphi 0, %s41
    %s46 = sphi 0, %s42
    %s47 = sphi 0, %s43
    %s48 = sphi 0, %s44
    %s49 = sphi 0, %s45
    %s50 = sphi 0, %s46
    %s51 = sphi 0, %s47
    %s52 = sphi 0, %s48
    %s53 = sphi 0, %s49
    %s54 = sphi 0, %s50
    %s55 = sphi 0, %s51
    %s56 = sphi 0, %s52
    %s57 = sphi 0, %s53
    %s58 = sphi 0, %s54
    %s59 = sphi 0, %s55
    %s60 = sphi 0, %s56
    %s61 = sphi 0, %s57
  $region4: #{reverse} parent=0 // loop_header_branch
    %6 = sbr.rel (%p4) target = $region8
  $region5: #{reverse} parent=0 // loop_body
    %s8 = ssub.s32 %s3, 1
    %s9 = ssub.s32 %s3, 2
    %s10 = ssub.s32 %s3, 3
    %s11 = ssub.s32 %s3, 4
    %s12 = ssub.s32 %s3, 5
    %s13 = ssub.s32 %s3, 6
    %s14 = ssub.s32 %s3, 7
    %s15 = ssub.s32 %s3, 8
    %s16 = ssub.s32 %s3, 9
    %s17 = ssub.s32 %s3, 10
    %s62 = sadd.s32 1, %s21
    %p63 = scmp.ge.s32.totalorder %s62, 1
    %s64 = scalar_select %p63, 0, %s62
    %s65 = sadd.s32 1, %s20
    %s66 = scalar_select %p63, %s65, %s20
    %p67 = scmp.ge.s32.totalorder %s66, 2
    %s68 = scalar_select %p67, 0, %s66
    %s69 = sadd.s32 1, %s19
    %s70 = scalar_select %p67, %s69, %s19
    %p71 = scmp.ge.s32.totalorder %s70, 3
    %s72 = scalar_select %p71, 0, %s70
    %s73 = sadd.s32 1, %s18
    %s74 = scalar_select %p71, %s73, %s18
    %p75 = scmp.ge.s32.totalorder %s74, 3
    %s76 = scalar_select %p75, 0, %s74
    %p77 = scmp.le.s32.totalorder 5, %s3
    %p78 = scmp.lt.s32.totalorder %s3, 23
    %p79 = pnand %p77, %p78
    %p80 = pneg %p79
    // Predicated region
    $region9: #{reverse} parent=5 // pred_check
      _
    $region10: #{reverse} parent=5 // pred_check_branch
      %82 = sbr.rel (%p79) target = $region12
    $region11: #{reverse} parent=5 // pred_region
      %s83 = ssub.s32 %s3, 5
    $region12: #{reverse} parent=5 // pred_fallthru
      _
    %p84 = scmp.lt.s32.totalorder %s3, 18
    // Predicated region
    $region13: #{reverse} parent=5 // pred_check
      %p85 = pneg %p84
    $region14: #{reverse} parent=5 // pred_check_branch
      %87 = sbr.rel (%p85) target = $region16
    $region15: #{reverse} parent=5 // pred_region
      %s88 = ssub.s32 2, %s18
      %s89 = ssub.s32 2, %s19
      %s90 = smul.u32 32, %s20
      %s91 = smul.u32 4, %s21
      %p92 = scmp.lt.s32.totalorder %s88, 2
      %s93 = scalar_select %p92, %s88, 2
      %p94 = scmp.lt.s32.totalorder %s89, 2
      %s95 = scalar_select %p94, %s89, 2
      %p96 = scmp.lt.s32.totalorder %s90, 63
      %s97 = scalar_select %p96, %s90, 63
      %p98 = scmp.lt.s32.totalorder %s91, 3
      %s99 = scalar_select %p98, %s91, 3
      %s100 = smul.addr %s97, 4
      %s101 = sadd.s32 %s99, %s100
      %s102 = smul.addr %s95, 256
      %s103 = sadd.s32 %s101, %s102
      %s104 = smul.addr %s93, 768
      %s105 = sadd.s32 %s103, %s104
      %s106 = smul.addr %s105, 8
      %s107 = scalar_lea.vmem %s0, %s106
      %s108 = ssub.s32 2, %s18
      %s109 = ssub.s32 2, %s19
      %s110 = smul.u32 32, %s20
      %s111 = smul.u32 4, %s21
    $region16: #{reverse} parent=5 // pred_fallthru
      _
    %p112 = scmp.le.s32.totalorder 5, %s3
    %p113 = scmp.lt.s32.totalorder %s3, 23
    %p114 = pnand %p112, %p113
    %p115 = pneg %p114
    // Predicated region
    $region17: #{reverse} parent=5 // pred_check
      _
    $region18: #{reverse} parent=5 // pred_check_branch
      %117 = sbr.rel (%p114) target = $region20
    $region19: #{reverse} parent=5 // pred_region
      %s118 = ssub.s32 %s3, 5
      %s119 = ssub.s32 2, %s38
      %s120 = ssub.s32 2, %s39
      %s121 = smul.u32 32, %s40
      %s122 = smul.u32 4, %s41
      %p123 = scmp.lt.s32.totalorder %s119, 2
      %s124 = scalar_select %p123, %s119, 2
      %p125 = scmp.lt.s32.totalorder %s120, 2
      %s126 = scalar_select %p125, %s120, 2
      %p127 = scmp.lt.s32.totalorder %s121, 63
      %s128 = scalar_select %p127, %s121, 63
      %p129 = scmp.lt.s32.totalorder %s122, 3
      %s130 = scalar_select %p129, %s122, 3
      %s131 = smul.addr %s128, 4
      %s132 = sadd.s32 %s130, %s131
      %s133 = smul.addr %s126, 256
      %s134 = sadd.s32 %s132, %s133
      %s135 = smul.addr %s124, 768
      %s136 = sadd.s32 %s134, %s135
      %s137 = smul.addr %s136, 8
      %s138 = scalar_lea.vmem %s0, %s137
      %s139 = smul.u32 32, %s40
      %s140 = smul.u32 4, %s41
      %p141 = scmp.lt.s32.totalorder %s38, 2
      %s142 = scalar_select %p141, %s38, 2
      %p143 = scmp.lt.s32.totalorder %s39, 2
      %s144 = scalar_select %p143, %s39, 2
      %p145 = scmp.lt.s32.totalorder %s139, 63
      %s146 = scalar_select %p145, %s139, 63
      %p147 = scmp.lt.s32.totalorder %s140, 3
      %s148 = scalar_select %p147, %s140, 3
      %s149 = smul.addr %s146, 4
      %s150 = sadd.s32 %s148, %s149
      %s151 = smul.addr %s144, 256
      %s152 = sadd.s32 %s150, %s151
      %s153 = smul.addr %s142, 768
      %s154 = sadd.s32 %s152, %s153
      %s155 = smul.addr %s154, 4
      %s156 = scalar_lea.vmem %s1, %s155
      %s157 = smul.u32 32, %s40
      %s158 = smul.u32 4, %s41
      %s159 = ssub.s32 2, %s38
      %s160 = ssub.s32 2, %s39
      %s161 = smul.u32 32, %s40
      %s162 = smul.u32 4, %s41
      %p163 = scmp.lt.s32.totalorder %s159, 2
      %s164 = scalar_select %p163, %s159, 2
      %p165 = scmp.lt.s32.totalorder %s160, 2
      %s166 = scalar_select %p165, %s160, 2
      %p167 = scmp.lt.s32.totalorder %s161, 63
      %s168 = scalar_select %p167, %s161, 63
      %p169 = scmp.lt.s32.totalorder %s162, 3
      %s170 = scalar_select %p169, %s162, 3
      %s171 = smul.addr %s168, 4
      %s172 = sadd.s32 %s170, %s171
      %s173 = smul.addr %s166, 256
      %s174 = sadd.s32 %s172, %s173
      %s175 = smul.addr %s164, 768
      %s176 = sadd.s32 %s174, %s175
      %s177 = smul.addr %s176, 8
      %s178 = scalar_lea.vmem %s0, %s177
      %s179 = ssub.s32 2, %s38
      %s180 = ssub.s32 2, %s39
      %s181 = smul.u32 32, %s40
      %s182 = smul.u32 4, %s41
      %s183 = smul.u32 32, %s40
      %s184 = smul.u32 4, %s41
      %p185 = scmp.lt.s32.totalorder %s38, 2
      %s186 = scalar_select %p185, %s38, 2
      %p187 = scmp.lt.s32.totalorder %s39, 2
      %s188 = scalar_select %p187, %s39, 2
      %p189 = scmp.lt.s32.totalorder %s183, 63
      %s190 = scalar_select %p189, %s183, 63
      %p191 = scmp.lt.s32.totalorder %s184, 3
      %s192 = scalar_select %p191, %s184, 3
      %s193 = smul.addr %s190, 4
      %s194 = sadd.s32 %s192, %s193
      %s195 = smul.addr %s188, 256
      %s196 = sadd.s32 %s194, %s195
      %s197 = smul.addr %s186, 768
      %s198 = sadd.s32 %s196, %s197
      %s199 = smul.addr %s198, 4
      %s200 = scalar_lea.vmem %s1, %s199
      %s201 = smul.u32 32, %s40
      %s202 = smul.u32 4, %s41
      %v203 = vld [vmem:[%s178] sm:$0xff]
      %s204 = scalar_lea.vmem %s178, 32
      %v205 = vld [vmem:[%s204] sm:$0xff]
      %s206 = scalar_lea.vmem %s200, 16
      %s207 = scalar_lea.vmem %s178, 64
      %v208 = vld [vmem:[%s207] sm:$0xff]
      %s209 = scalar_lea.vmem %s200, 32
      %s210 = scalar_lea.vmem %s178, 96
      %v211 = vld [vmem:[%s210] sm:$0xff]
      %s212 = scalar_lea.vmem %s200, 48
      %s213 = scalar_lea.vmem %s178, 128
      %v214 = vld [vmem:[%s213] sm:$0xff]
      %s215 = scalar_lea.vmem %s200, 64
      %s216 = scalar_lea.vmem %s178, 160
      %v217 = vld [vmem:[%s216] sm:$0xff]
      %s218 = scalar_lea.vmem %s200, 80
      %s219 = scalar_lea.vmem %s178, 192
      %v220 = vld [vmem:[%s219] sm:$0xff]
      %s221 = scalar_lea.vmem %s200, 96
      %s222 = scalar_lea.vmem %s178, 224
      %v223 = vld [vmem:[%s222] sm:$0xff]
      %s224 = scalar_lea.vmem %s200, 112
      %s225 = scalar_lea.vmem %s178, 256
      %v226 = vld [vmem:[%s225] sm:$0xff]
      %s227 = scalar_lea.vmem %s200, 128
      %s228 = scalar_lea.vmem %s178, 288
      %v229 = vld [vmem:[%s228] sm:$0xff]
      %s230 = scalar_lea.vmem %s200, 144
      %s231 = scalar_lea.vmem %s178, 320
      %v232 = vld [vmem:[%s231] sm:$0xff]
      %s233 = scalar_lea.vmem %s200, 160
      %s234 = scalar_lea.vmem %s178, 352
      %v235 = vld [vmem:[%s234] sm:$0xff]
      %s236 = scalar_lea.vmem %s200, 176
      %s237 = scalar_lea.vmem %s178, 384
      %v238 = vld [vmem:[%s237] sm:$0xff]
      %s239 = scalar_lea.vmem %s200, 192
      %s240 = scalar_lea.vmem %s178, 416
      %v241 = vld [vmem:[%s240] sm:$0xff]
      %s242 = scalar_lea.vmem %s200, 208
      %s243 = scalar_lea.vmem %s178, 448
      %v244 = vld [vmem:[%s243] sm:$0xff]
      %s245 = scalar_lea.vmem %s200, 224
      %s246 = scalar_lea.vmem %s178, 480
      %v247 = vld [vmem:[%s246] sm:$0xff]
      %s248 = scalar_lea.vmem %s200, 240
      %s249 = scalar_lea.vmem %s178, 512
      %v250 = vld [vmem:[%s249] sm:$0xff]
      %s251 = scalar_lea.vmem %s200, 256
      %s252 = scalar_lea.vmem %s178, 544
      %v253 = vld [vmem:[%s252] sm:$0xff]
      %s254 = scalar_lea.vmem %s200, 272
      %s255 = scalar_lea.vmem %s178, 576
      %v256 = vld [vmem:[%s255] sm:$0xff]
      %s257 = scalar_lea.vmem %s200, 288
      %s258 = scalar_lea.vmem %s178, 608
      %v259 = vld [vmem:[%s258] sm:$0xff]
      %s260 = scalar_lea.vmem %s200, 304
      %s261 = scalar_lea.vmem %s178, 640
      %v262 = vld [vmem:[%s261] sm:$0xff]
      %s263 = scalar_lea.vmem %s200, 320
      %s264 = scalar_lea.vmem %s178, 672
      %v265 = vld [vmem:[%s264] sm:$0xff]
      %s266 = scalar_lea.vmem %s200, 336
      %s267 = scalar_lea.vmem %s178, 704
      %v268 = vld [vmem:[%s267] sm:$0xff]
      %s269 = scalar_lea.vmem %s200, 352
      %s270 = scalar_lea.vmem %s178, 736
      %v271 = vld [vmem:[%s270] sm:$0xff]
      %s272 = scalar_lea.vmem %s200, 368
      %s273 = scalar_lea.vmem %s178, 768
      %v274 = vld [vmem:[%s273] sm:$0xff]
      %s275 = scalar_lea.vmem %s200, 384
      %s276 = scalar_lea.vmem %s178, 800
      %v277 = vld [vmem:[%s276] sm:$0xff]
      %s278 = scalar_lea.vmem %s200, 400
      %s279 = scalar_lea.vmem %s178, 832
      %v280 = vld [vmem:[%s279] sm:$0xff]
      %s281 = scalar_lea.vmem %s200, 416
      %s282 = scalar_lea.vmem %s178, 864
      %v283 = vld [vmem:[%s282] sm:$0xff]
      %s284 = scalar_lea.vmem %s200, 432
      %s285 = scalar_lea.vmem %s178, 896
      %v286 = vld [vmem:[%s285] sm:$0xff]
      %s287 = scalar_lea.vmem %s200, 448
      %s288 = scalar_lea.vmem %s178, 928
      %v289 = vld [vmem:[%s288] sm:$0xff]
      %s290 = scalar_lea.vmem %s200, 464
      %s291 = scalar_lea.vmem %s178, 960
      %v292 = vld [vmem:[%s291] sm:$0xff]
      %s293 = scalar_lea.vmem %s200, 480
      %s294 = scalar_lea.vmem %s178, 992
      %v295 = vld [vmem:[%s294] sm:$0xff]
      %s296 = scalar_lea.vmem %s200, 496
      %s297 = scalar_lea.vmem %s178, 8
      %v298 = vld [vmem:[%s297] sm:$0xff]
      %s299 = scalar_lea.vmem %s200, 4
      %s300 = scalar_lea.vmem %s299, 4294967292
      %v301 = vpack.c.bf16 %v298, %v203
      %302 = vst [vmem:[%s300] sm:$0xff] %v301
      %s303 = scalar_lea.vmem %s178, 40
      %v304 = vld [vmem:[%s303] sm:$0xff]
      %s305 = scalar_lea.vmem %s200, 20
      %s306 = scalar_lea.vmem %s305, 4294967292
      %v307 = vpack.c.bf16 %v304, %v205
      %308 = vst [vmem:[%s306] sm:$0xff] %v307
      %s309 = scalar_lea.vmem %s178, 72
      %v310 = vld [vmem:[%s309] sm:$0xff]
      %s311 = scalar_lea.vmem %s200, 36
      %s312 = scalar_lea.vmem %s311, 4294967292
      %v313 = vpack.c.bf16 %v310, %v208
      %314 = vst [vmem:[%s312] sm:$0xff] %v313
      %s315 = scalar_lea.vmem %s178, 104
      %v316 = vld [vmem:[%s315] sm:$0xff]
      %s317 = scalar_lea.vmem %s200, 52
      %s318 = scalar_lea.vmem %s317, 4294967292
      %v319 = vpack.c.bf16 %v316, %v211
      %320 = vst [vmem:[%s318] sm:$0xff] %v319
      %s321 = scalar_lea.vmem %s178, 136
      %v322 = vld [vmem:[%s321] sm:$0xff]
      %s323 = scalar_lea.vmem %s200, 68
      %s324 = scalar_lea.vmem %s323, 4294967292
      %v325 = vpack.c.bf16 %v322, %v214
      %326 = vst [vmem:[%s324] sm:$0xff] %v325
      %s327 = scalar_lea.vmem %s178, 168
      %v328 = vld [vmem:[%s327] sm:$0xff]
      %s329 = scalar_lea.vmem %s200, 84
      %s330 = scalar_lea.vmem %s329, 4294967292
      %v331 = vpack.c.bf16 %v328, %v217
      %332 = vst [vmem:[%s330] sm:$0xff] %v331
      %s333 = scalar_lea.vmem %s178, 200
      %v334 = vld [vmem:[%s333] sm:$0xff]
      %s335 = scalar_lea.vmem %s200, 100
      %s336 = scalar_lea.vmem %s335, 4294967292
      %v337 = vpack.c.bf16 %v334, %v220
      %338 = vst [vmem:[%s336] sm:$0xff] %v337
      %s339 = scalar_lea.vmem %s178, 232
      %v340 = vld [vmem:[%s339] sm:$0xff]
      %s341 = scalar_lea.vmem %s200, 116
      %s342 = scalar_lea.vmem %s341, 4294967292
      %v343 = vpack.c.bf16 %v340, %v223
      %344 = vst [vmem:[%s342] sm:$0xff] %v343
      %s345 = scalar_lea.vmem %s178, 264
      %v346 = vld [vmem:[%s345] sm:$0xff]
      %s347 = scalar_lea.vmem %s200, 132
      %s348 = scalar_lea.vmem %s347, 4294967292
      %v349 = vpack.c.bf16 %v346, %v226
      %350 = vst [vmem:[%s348] sm:$0xff] %v349
      %s351 = scalar_lea.vmem %s178, 296
      %v352 = vld [vmem:[%s351] sm:$0xff]
      %s353 = scalar_lea.vmem %s200, 148
      %s354 = scalar_lea.vmem %s353, 4294967292
      %v355 = vpack.c.bf16 %v352, %v229
      %356 = vst [vmem:[%s354] sm:$0xff] %v355
      %s357 = scalar_lea.vmem %s178, 328
      %v358 = vld [vmem:[%s357] sm:$0xff]
      %s359 = scalar_lea.vmem %s200, 164
      %s360 = scalar_lea.vmem %s359, 4294967292
      %v361 = vpack.c.bf16 %v358, %v232
      %362 = vst [vmem:[%s360] sm:$0xff] %v361
      %s363 = scalar_lea.vmem %s178, 360
      %v364 = vld [vmem:[%s363] sm:$0xff]
      %s365 = scalar_lea.vmem %s200, 180
      %s366 = scalar_lea.vmem %s365, 4294967292
      %v367 = vpack.c.bf16 %v364, %v235
      %368 = vst [vmem:[%s366] sm:$0xff] %v367
      %s369 = scalar_lea.vmem %s178, 392
      %v370 = vld [vmem:[%s369] sm:$0xff]
      %s371 = scalar_lea.vmem %s200, 196
      %s372 = scalar_lea.vmem %s371, 4294967292
      %v373 = vpack.c.bf16 %v370, %v238
      %374 = vst [vmem:[%s372] sm:$0xff] %v373
      %s375 = scalar_lea.vmem %s178, 424
      %v376 = vld [vmem:[%s375] sm:$0xff]
      %s377 = scalar_lea.vmem %s200, 212
      %s378 = scalar_lea.vmem %s377, 4294967292
      %v379 = vpack.c.bf16 %v376, %v241
      %380 = vst [vmem:[%s378] sm:$0xff] %v379
      %s381 = scalar_lea.vmem %s178, 456
      %v382 = vld [vmem:[%s381] sm:$0xff]
      %s383 = scalar_lea.vmem %s200, 228
      %s384 = scalar_lea.vmem %s383, 4294967292
      %v385 = vpack.c.bf16 %v382, %v244
      %386 = vst [vmem:[%s384] sm:$0xff] %v385
      %s387 = scalar_lea.vmem %s178, 488
      %v388 = vld [vmem:[%s387] sm:$0xff]
      %s389 = scalar_lea.vmem %s200, 244
      %s390 = scalar_lea.vmem %s389, 4294967292
      %v391 = vpack.c.bf16 %v388, %v247
      %392 = vst [vmem:[%s390] sm:$0xff] %v391
      %s393 = scalar_lea.vmem %s178, 520
      %v394 = vld [vmem:[%s393] sm:$0xff]
      %s395 = scalar_lea.vmem %s200, 260
      %s396 = scalar_lea.vmem %s395, 4294967292
      %v397 = vpack.c.bf16 %v394, %v250
      %398 = vst [vmem:[%s396] sm:$0xff] %v397
      %s399 = scalar_lea.vmem %s178, 552
      %v400 = vld [vmem:[%s399] sm:$0xff]
      %s401 = scalar_lea.vmem %s200, 276
      %s402 = scalar_lea.vmem %s401, 4294967292
      %v403 = vpack.c.bf16 %v400, %v253
      %404 = vst [vmem:[%s402] sm:$0xff] %v403
      %s405 = scalar_lea.vmem %s178, 584
      %v406 = vld [vmem:[%s405] sm:$0xff]
      %s407 = scalar_lea.vmem %s200, 292
      %s408 = scalar_lea.vmem %s407, 4294967292
      %v409 = vpack.c.bf16 %v406, %v256
      %410 = vst [vmem:[%s408] sm:$0xff] %v409
      %s411 = scalar_lea.vmem %s178, 616
      %v412 = vld [vmem:[%s411] sm:$0xff]
      %s413 = scalar_lea.vmem %s200, 308
      %s414 = scalar_lea.vmem %s413, 4294967292
      %v415 = vpack.c.bf16 %v412, %v259
      %416 = vst [vmem:[%s414] sm:$0xff] %v415
      %s417 = scalar_lea.vmem %s178, 648
      %v418 = vld [vmem:[%s417] sm:$0xff]
      %s419 = scalar_lea.vmem %s200, 324
      %s420 = scalar_lea.vmem %s419, 4294967292
      %v421 = vpack.c.bf16 %v418, %v262
      %422 = vst [vmem:[%s420] sm:$0xff] %v421
      %s423 = scalar_lea.vmem %s178, 680
      %v424 = vld [vmem:[%s423] sm:$0xff]
      %s425 = scalar_lea.vmem %s200, 340
      %s426 = scalar_lea.vmem %s425, 4294967292
      %v427 = vpack.c.bf16 %v424, %v265
      %428 = vst [vmem:[%s426] sm:$0xff] %v427
      %s429 = scalar_lea.vmem %s178, 712
      %v430 = vld [vmem:[%s429] sm:$0xff]
      %s431 = scalar_lea.vmem %s200, 356
      %s432 = scalar_lea.vmem %s431, 4294967292
      %v433 = vpack.c.bf16 %v430, %v268
      %434 = vst [vmem:[%s432] sm:$0xff] %v433
      %s435 = scalar_lea.vmem %s178, 744
      %v436 = vld [vmem:[%s435] sm:$0xff]
      %s437 = scalar_lea.vmem %s200, 372
      %s438 = scalar_lea.vmem %s437, 4294967292
      %v439 = vpack.c.bf16 %v436, %v271
      %440 = vst [vmem:[%s438] sm:$0xff] %v439
      %s441 = scalar_lea.vmem %s178, 776
      %v442 = vld [vmem:[%s441] sm:$0xff]
      %s443 = scalar_lea.vmem %s200, 388
      %s444 = scalar_lea.vmem %s443, 4294967292
      %v445 = vpack.c.bf16 %v442, %v274
      %446 = vst [vmem:[%s444] sm:$0xff] %v445
      %s447 = scalar_lea.vmem %s178, 808
      %v448 = vld [vmem:[%s447] sm:$0xff]
      %s449 = scalar_lea.vmem %s200, 404
      %s450 = scalar_lea.vmem %s449, 4294967292
      %v451 = vpack.c.bf16 %v448, %v277
      %452 = vst [vmem:[%s450] sm:$0xff] %v451
      %s453 = scalar_lea.vmem %s178, 840
      %v454 = vld [vmem:[%s453] sm:$0xff]
      %s455 = scalar_lea.vmem %s200, 420
      %s456 = scalar_lea.vmem %s455, 4294967292
      %v457 = vpack.c.bf16 %v454, %v280
      %458 = vst [vmem:[%s456] sm:$0xff] %v457
      %s459 = scalar_lea.vmem %s178, 872
      %v460 = vld [vmem:[%s459] sm:$0xff]
      %s461 = scalar_lea.vmem %s200, 436
      %s462 = scalar_lea.vmem %s461, 4294967292
      %v463 = vpack.c.bf16 %v460, %v283
      %464 = vst [vmem:[%s462] sm:$0xff] %v463
      %s465 = scalar_lea.vmem %s178, 904
      %v466 = vld [vmem:[%s465] sm:$0xff]
      %s467 = scalar_lea.vmem %s200, 452
      %s468 = scalar_lea.vmem %s467, 4294967292
      %v469 = vpack.c.bf16 %v466, %v286
      %470 = vst [vmem:[%s468] sm:$0xff] %v469
      %s471 = scalar_lea.vmem %s178, 936
      %v472 = vld [vmem:[%s471] sm:$0xff]
      %s473 = scalar_lea.vmem %s200, 468
      %s474 = scalar_lea.vmem %s473, 4294967292
      %v475 = vpack.c.bf16 %v472, %v289
      %476 = vst [vmem:[%s474] sm:$0xff] %v475
      %s477 = scalar_lea.vmem %s178, 968
      %v478 = vld [vmem:[%s477] sm:$0xff]
      %s479 = scalar_lea.vmem %s200, 484
      %s480 = scalar_lea.vmem %s479, 4294967292
      %v481 = vpack.c.bf16 %v478, %v292
      %482 = vst [vmem:[%s480] sm:$0xff] %v481
      %s483 = scalar_lea.vmem %s178, 1000
      %v484 = vld [vmem:[%s483] sm:$0xff]
      %s485 = scalar_lea.vmem %s200, 500
      %s486 = scalar_lea.vmem %s485, 4294967292
      %v487 = vpack.c.bf16 %v484, %v295
      %488 = vst [vmem:[%s486] sm:$0xff] %v487
      %s489 = scalar_lea.vmem %s178, 16
      %v490 = vld [vmem:[%s489] sm:$0xff]
      %s491 = scalar_lea.vmem %s200, 8
      %s492 = scalar_lea.vmem %s178, 48
      %v493 = vld [vmem:[%s492] sm:$0xff]
      %s494 = scalar_lea.vmem %s200, 24
      %s495 = scalar_lea.vmem %s178, 80
      %v496 = vld [vmem:[%s495] sm:$0xff]
      %s497 = scalar_lea.vmem %s200, 40
      %s498 = scalar_lea.vmem %s178, 112
      %v499 = vld [vmem:[%s498] sm:$0xff]
      %s500 = scalar_lea.vmem %s200, 56
      %s501 = scalar_lea.vmem %s178, 144
      %v502 = vld [vmem:[%s501] sm:$0xff]
      %s503 = scalar_lea.vmem %s200, 72
      %s504 = scalar_lea.vmem %s178, 176
      %v505 = vld [vmem:[%s504] sm:$0xff]
      %s506 = scalar_lea.vmem %s200, 88
      %s507 = scalar_lea.vmem %s178, 208
      %v508 = vld [vmem:[%s507] sm:$0xff]
      %s509 = scalar_lea.vmem %s200, 104
      %s510 = scalar_lea.vmem %s178, 240
      %v511 = vld [vmem:[%s510] sm:$0xff]
      %s512 = scalar_lea.vmem %s200, 120
      %s513 = scalar_lea.vmem %s178, 272
      %v514 = vld [vmem:[%s513] sm:$0xff]
      %s515 = scalar_lea.vmem %s200, 136
      %s516 = scalar_lea.vmem %s178, 304
      %v517 = vld [vmem:[%s516] sm:$0xff]
      %s518 = scalar_lea.vmem %s200, 152
      %s519 = scalar_lea.vmem %s178, 336
      %v520 = vld [vmem:[%s519] sm:$0xff]
      %s521 = scalar_lea.vmem %s200, 168
      %s522 = scalar_lea.vmem %s178, 368
      %v523 = vld [vmem:[%s522] sm:$0xff]
      %s524 = scalar_lea.vmem %s200, 184
      %s525 = scalar_lea.vmem %s178, 400
      %v526 = vld [vmem:[%s525] sm:$0xff]
      %s527 = scalar_lea.vmem %s200, 200
      %s528 = scalar_lea.vmem %s178, 432
      %v529 = vld [vmem:[%s528] sm:$0xff]
      %s530 = scalar_lea.vmem %s200, 216
      %s531 = scalar_lea.vmem %s178, 464
      %v532 = vld [vmem:[%s531] sm:$0xff]
      %s533 = scalar_lea.vmem %s200, 232
      %s534 = scalar_lea.vmem %s178, 496
      %v535 = vld [vmem:[%s534] sm:$0xff]
      %s536 = scalar_lea.vmem %s200, 248
      %s537 = scalar_lea.vmem %s178, 528
      %v538 = vld [vmem:[%s537] sm:$0xff]
      %s539 = scalar_lea.vmem %s200, 264
      %s540 = scalar_lea.vmem %s178, 560
      %v541 = vld [vmem:[%s540] sm:$0xff]
      %s542 = scalar_lea.vmem %s200, 280
      %s543 = scalar_lea.vmem %s178, 592
      %v544 = vld [vmem:[%s543] sm:$0xff]
      %s545 = scalar_lea.vmem %s200, 296
      %s546 = scalar_lea.vmem %s178, 624
      %v547 = vld [vmem:[%s546] sm:$0xff]
      %s548 = scalar_lea.vmem %s200, 312
      %s549 = scalar_lea.vmem %s178, 656
      %v550 = vld [vmem:[%s549] sm:$0xff]
      %s551 = scalar_lea.vmem %s200, 328
      %s552 = scalar_lea.vmem %s178, 688
      %v553 = vld [vmem:[%s552] sm:$0xff]
      %s554 = scalar_lea.vmem %s200, 344
      %s555 = scalar_lea.vmem %s178, 720
      %v556 = vld [vmem:[%s555] sm:$0xff]
      %s557 = scalar_lea.vmem %s200, 360
      %s558 = scalar_lea.vmem %s178, 752
      %v559 = vld [vmem:[%s558] sm:$0xff]
      %s560 = scalar_lea.vmem %s200, 376
      %s561 = scalar_lea.vmem %s178, 784
      %v562 = vld [vmem:[%s561] sm:$0xff]
      %s563 = scalar_lea.vmem %s200, 392
      %s564 = scalar_lea.vmem %s178, 816
      %v565 = vld [vmem:[%s564] sm:$0xff]
      %s566 = scalar_lea.vmem %s200, 408
      %s567 = scalar_lea.vmem %s178, 848
      %v568 = vld [vmem:[%s567] sm:$0xff]
      %s569 = scalar_lea.vmem %s200, 424
      %s570 = scalar_lea.vmem %s178, 880
      %v571 = vld [vmem:[%s570] sm:$0xff]
      %s572 = scalar_lea.vmem %s200, 440
      %s573 = scalar_lea.vmem %s178, 912
      %v574 = vld [vmem:[%s573] sm:$0xff]
      %s575 = scalar_lea.vmem %s200, 456
      %s576 = scalar_lea.vmem %s178, 944
      %v577 = vld [vmem:[%s576] sm:$0xff]
      %s578 = scalar_lea.vmem %s200, 472
      %s579 = scalar_lea.vmem %s178, 976
      %v580 = vld [vmem:[%s579] sm:$0xff]
      %s581 = scalar_lea.vmem %s200, 488
      %s582 = scalar_lea.vmem %s178, 1008
      %v583 = vld [vmem:[%s582] sm:$0xff]
      %s584 = scalar_lea.vmem %s200, 504
      %s585 = scalar_lea.vmem %s178, 24
      %v586 = vld [vmem:[%s585] sm:$0xff]
      %s587 = scalar_lea.vmem %s200, 12
      %s588 = scalar_lea.vmem %s587, 4294967292
      %v589 = vpack.c.bf16 %v586, %v490
      %590 = vst [vmem:[%s588] sm:$0xff] %v589
      %s591 = scalar_lea.vmem %s178, 56
      %v592 = vld [vmem:[%s591] sm:$0xff]
      %s593 = scalar_lea.vmem %s200, 28
      %s594 = scalar_lea.vmem %s593, 4294967292
      %v595 = vpack.c.bf16 %v592, %v493
      %596 = vst [vmem:[%s594] sm:$0xff] %v595
      %s597 = scalar_lea.vmem %s178, 88
      %v598 = vld [vmem:[%s597] sm:$0xff]
      %s599 = scalar_lea.vmem %s200, 44
      %s600 = scalar_lea.vmem %s599, 4294967292
      %v601 = vpack.c.bf16 %v598, %v496
      %602 = vst [vmem:[%s600] sm:$0xff] %v601
      %s603 = scalar_lea.vmem %s178, 120
      %v604 = vld [vmem:[%s603] sm:$0xff]
      %s605 = scalar_lea.vmem %s200, 60
      %s606 = scalar_lea.vmem %s605, 4294967292
      %v607 = vpack.c.bf16 %v604, %v499
      %608 = vst [vmem:[%s606] sm:$0xff] %v607
      %s609 = scalar_lea.vmem %s178, 152
      %v610 = vld [vmem:[%s609] sm:$0xff]
      %s611 = scalar_lea.vmem %s200, 76
      %s612 = scalar_lea.vmem %s611, 4294967292
      %v613 = vpack.c.bf16 %v610, %v502
      %614 = vst [vmem:[%s612] sm:$0xff] %v613
      %s615 = scalar_lea.vmem %s178, 184
      %v616 = vld [vmem:[%s615] sm:$0xff]
      %s617 = scalar_lea.vmem %s200, 92
      %s618 = scalar_lea.vmem %s617, 4294967292
      %v619 = vpack.c.bf16 %v616, %v505
      %620 = vst [vmem:[%s618] sm:$0xff] %v619
      %s621 = scalar_lea.vmem %s178, 216
      %v622 = vld [vmem:[%s621] sm:$0xff]
      %s623 = scalar_lea.vmem %s200, 108
      %s624 = scalar_lea.vmem %s623, 4294967292
      %v625 = vpack.c.bf16 %v622, %v508
      %626 = vst [vmem:[%s624] sm:$0xff] %v625
      %s627 = scalar_lea.vmem %s178, 248
      %v628 = vld [vmem:[%s627] sm:$0xff]
      %s629 = scalar_lea.vmem %s200, 124
      %s630 = scalar_lea.vmem %s629, 4294967292
      %v631 = vpack.c.bf16 %v628, %v511
      %632 = vst [vmem:[%s630] sm:$0xff] %v631
      %s633 = scalar_lea.vmem %s178, 280
      %v634 = vld [vmem:[%s633] sm:$0xff]
      %s635 = scalar_lea.vmem %s200, 140
      %s636 = scalar_lea.vmem %s635, 4294967292
      %v637 = vpack.c.bf16 %v634, %v514
      %638 = vst [vmem:[%s636] sm:$0xff] %v637
      %s639 = scalar_lea.vmem %s178, 312
      %v640 = vld [vmem:[%s639] sm:$0xff]
      %s641 = scalar_lea.vmem %s200, 156
      %s642 = scalar_lea.vmem %s641, 4294967292
      %v643 = vpack.c.bf16 %v640, %v517
      %644 = vst [vmem:[%s642] sm:$0xff] %v643
      %s645 = scalar_lea.vmem %s178, 344
      %v646 = vld [vmem:[%s645] sm:$0xff]
      %s647 = scalar_lea.vmem %s200, 172
      %s648 = scalar_lea.vmem %s647, 4294967292
      %v649 = vpack.c.bf16 %v646, %v520
      %650 = vst [vmem:[%s648] sm:$0xff] %v649
      %s651 = scalar_lea.vmem %s178, 376
      %v652 = vld [vmem:[%s651] sm:$0xff]
      %s653 = scalar_lea.vmem %s200, 188
      %s654 = scalar_lea.vmem %s653, 4294967292
      %v655 = vpack.c.bf16 %v652, %v523
      %656 = vst [vmem:[%s654] sm:$0xff] %v655
      %s657 = scalar_lea.vmem %s178, 408
      %v658 = vld [vmem:[%s657] sm:$0xff]
      %s659 = scalar_lea.vmem %s200, 204
      %s660 = scalar_lea.vmem %s659, 4294967292
      %v661 = vpack.c.bf16 %v658, %v526
      %662 = vst [vmem:[%s660] sm:$0xff] %v661
      %s663 = scalar_lea.vmem %s178, 440
      %v664 = vld [vmem:[%s663] sm:$0xff]
      %s665 = scalar_lea.vmem %s200, 220
      %s666 = scalar_lea.vmem %s665, 4294967292
      %v667 = vpack.c.bf16 %v664, %v529
      %668 = vst [vmem:[%s666] sm:$0xff] %v667
      %s669 = scalar_lea.vmem %s178, 472
      %v670 = vld [vmem:[%s669] sm:$0xff]
      %s671 = scalar_lea.vmem %s200, 236
      %s672 = scalar_lea.vmem %s671, 4294967292
      %v673 = vpack.c.bf16 %v670, %v532
      %674 = vst [vmem:[%s672] sm:$0xff] %v673
      %s675 = scalar_lea.vmem %s178, 504
      %v676 = vld [vmem:[%s675] sm:$0xff]
      %s677 = scalar_lea.vmem %s200, 252
      %s678 = scalar_lea.vmem %s677, 4294967292
      %v679 = vpack.c.bf16 %v676, %v535
      %680 = vst [vmem:[%s678] sm:$0xff] %v679
      %s681 = scalar_lea.vmem %s178, 536
      %v682 = vld [vmem:[%s681] sm:$0xff]
      %s683 = scalar_lea.vmem %s200, 268
      %s684 = scalar_lea.vmem %s683, 4294967292
      %v685 = vpack.c.bf16 %v682, %v538
      %686 = vst [vmem:[%s684] sm:$0xff] %v685
      %s687 = scalar_lea.vmem %s178, 568
      %v688 = vld [vmem:[%s687] sm:$0xff]
      %s689 = scalar_lea.vmem %s200, 284
      %s690 = scalar_lea.vmem %s689, 4294967292
      %v691 = vpack.c.bf16 %v688, %v541
      %692 = vst [vmem:[%s690] sm:$0xff] %v691
      %s693 = scalar_lea.vmem %s178, 600
      %v694 = vld [vmem:[%s693] sm:$0xff]
      %s695 = scalar_lea.vmem %s200, 300
      %s696 = scalar_lea.vmem %s695, 4294967292
      %v697 = vpack.c.bf16 %v694, %v544
      %698 = vst [vmem:[%s696] sm:$0xff] %v697
      %s699 = scalar_lea.vmem %s178, 632
      %v700 = vld [vmem:[%s699] sm:$0xff]
      %s701 = scalar_lea.vmem %s200, 316
      %s702 = scalar_lea.vmem %s701, 4294967292
      %v703 = vpack.c.bf16 %v700, %v547
      %704 = vst [vmem:[%s702] sm:$0xff] %v703
      %s705 = scalar_lea.vmem %s178, 664
      %v706 = vld [vmem:[%s705] sm:$0xff]
      %s707 = scalar_lea.vmem %s200, 332
      %s708 = scalar_lea.vmem %s707, 4294967292
      %v709 = vpack.c.bf16 %v706, %v550
      %710 = vst [vmem:[%s708] sm:$0xff] %v709
      %s711 = scalar_lea.vmem %s178, 696
      %v712 = vld [vmem:[%s711] sm:$0xff]
      %s713 = scalar_lea.vmem %s200, 348
      %s714 = scalar_lea.vmem %s713, 4294967292
      %v715 = vpack.c.bf16 %v712, %v553
      %716 = vst [vmem:[%s714] sm:$0xff] %v715
      %s717 = scalar_lea.vmem %s178, 728
      %v718 = vld [vmem:[%s717] sm:$0xff]
      %s719 = scalar_lea.vmem %s200, 364
      %s720 = scalar_lea.vmem %s719, 4294967292
      %v721 = vpack.c.bf16 %v718, %v556
      %722 = vst [vmem:[%s720] sm:$0xff] %v721
      %s723 = scalar_lea.vmem %s178, 760
      %v724 = vld [vmem:[%s723] sm:$0xff]
      %s725 = scalar_lea.vmem %s200, 380
      %s726 = scalar_lea.vmem %s725, 4294967292
      %v727 = vpack.c.bf16 %v724, %v559
      %728 = vst [vmem:[%s726] sm:$0xff] %v727
      %s729 = scalar_lea.vmem %s178, 792
      %v730 = vld [vmem:[%s729] sm:$0xff]
      %s731 = scalar_lea.vmem %s200, 396
      %s732 = scalar_lea.vmem %s731, 4294967292
      %v733 = vpack.c.bf16 %v730, %v562
      %734 = vst [vmem:[%s732] sm:$0xff] %v733
      %s735 = scalar_lea.vmem %s178, 824
      %v736 = vld [vmem:[%s735] sm:$0xff]
      %s737 = scalar_lea.vmem %s200, 412
      %s738 = scalar_lea.vmem %s737, 4294967292
      %v739 = vpack.c.bf16 %v736, %v565
      %740 = vst [vmem:[%s738] sm:$0xff] %v739
      %s741 = scalar_lea.vmem %s178, 856
      %v742 = vld [vmem:[%s741] sm:$0xff]
      %s743 = scalar_lea.vmem %s200, 428
      %s744 = scalar_lea.vmem %s743, 4294967292
      %v745 = vpack.c.bf16 %v742, %v568
      %746 = vst [vmem:[%s744] sm:$0xff] %v745
      %s747 = scalar_lea.vmem %s178, 888
      %v748 = vld [vmem:[%s747] sm:$0xff]
      %s749 = scalar_lea.vmem %s200, 444
      %s750 = scalar_lea.vmem %s749, 4294967292
      %v751 = vpack.c.bf16 %v748, %v571
      %752 = vst [vmem:[%s750] sm:$0xff] %v751
      %s753 = scalar_lea.vmem %s178, 920
      %v754 = vld [vmem:[%s753] sm:$0xff]
      %s755 = scalar_lea.vmem %s200, 460
      %s756 = scalar_lea.vmem %s755, 4294967292
      %v757 = vpack.c.bf16 %v754, %v574
      %758 = vst [vmem:[%s756] sm:$0xff] %v757
      %s759 = scalar_lea.vmem %s178, 952
      %v760 = vld [vmem:[%s759] sm:$0xff]
      %s761 = scalar_lea.vmem %s200, 476
      %s762 = scalar_lea.vmem %s761, 4294967292
      %v763 = vpack.c.bf16 %v760, %v577
      %764 = vst [vmem:[%s762] sm:$0xff] %v763
      %s765 = scalar_lea.vmem %s178, 984
      %v766 = vld [vmem:[%s765] sm:$0xff]
      %s767 = scalar_lea.vmem %s200, 492
      %s768 = scalar_lea.vmem %s767, 4294967292
      %v769 = vpack.c.bf16 %v766, %v580
      %770 = vst [vmem:[%s768] sm:$0xff] %v769
      %s771 = scalar_lea.vmem %s178, 1016
      %v772 = vld [vmem:[%s771] sm:$0xff]
      %s773 = scalar_lea.vmem %s200, 508
      %s774 = scalar_lea.vmem %s773, 4294967292
      %v775 = vpack.c.bf16 %v772, %v583
      %776 = vst [vmem:[%s774] sm:$0xff] %v775
      %s777 = smul.u32 32, %s40
      %s778 = smul.u32 4, %s41
      %p779 = scmp.lt.s32.totalorder %s38, 2
      %s780 = scalar_select %p779, %s38, 2
      %p781 = scmp.lt.s32.totalorder %s39, 2
      %s782 = scalar_select %p781, %s39, 2
      %p783 = scmp.lt.s32.totalorder %s777, 63
      %s784 = scalar_select %p783, %s777, 63
      %p785 = scmp.lt.s32.totalorder %s778, 3
      %s786 = scalar_select %p785, %s778, 3
      %s787 = smul.addr %s784, 4
      %s788 = sadd.s32 %s786, %s787
      %s789 = smul.addr %s782, 256
      %s790 = sadd.s32 %s788, %s789
      %s791 = smul.addr %s780, 768
      %s792 = sadd.s32 %s790, %s791
      %s793 = smul.addr %s792, 4
      %s794 = scalar_lea.vmem %s1, %s793
      %s795 = smul.u32 32, %s40
      %s796 = smul.u32 4, %s41
    $region20: #{reverse} parent=5 // pred_fallthru
      _
    %p797 = scmp.le.s32.totalorder 10, %s3
    // Predicated region
    $region21: #{reverse} parent=5 // pred_check
      %p798 = pneg %p797
    $region22: #{reverse} parent=5 // pred_check_branch
      %800 = sbr.rel (%p798) target = $region24
    $region23: #{reverse} parent=5 // pred_region
      %s801 = ssub.s32 %s3, 10
      %s802 = smul.u32 32, %s60
      %s803 = smul.u32 4, %s61
      %p804 = scmp.lt.s32.totalorder %s58, 2
      %s805 = scalar_select %p804, %s58, 2
      %p806 = scmp.lt.s32.totalorder %s59, 2
      %s807 = scalar_select %p806, %s59, 2
      %p808 = scmp.lt.s32.totalorder %s802, 63
      %s809 = scalar_select %p808, %s802, 63
      %p810 = scmp.lt.s32.totalorder %s803, 3
      %s811 = scalar_select %p810, %s803, 3
      %s812 = smul.addr %s809, 4
      %s813 = sadd.s32 %s811, %s812
      %s814 = smul.addr %s807, 256
      %s815 = sadd.s32 %s813, %s814
      %s816 = smul.addr %s805, 768
      %s817 = sadd.s32 %s815, %s816
      %s818 = smul.addr %s817, 4
      %s819 = scalar_lea.vmem %s1, %s818
    $region24: #{reverse} parent=5 // pred_fallthru
      _
  $region6: #{reverse} parent=0 // loop_footer
    %s7 = sadd.s32 1, %s3
  $region7: #{reverse} parent=0 // loop_footer_branch
    %2 = sbr.rel target = $region3
  $region8: #{reverse} parent=0 // loop_exit
    _

// kernel: bnneck_forward.1
$region0: #{bnneck_forward.1}
  #allocation0 [shape = 'u32[]', space=smem, size = 0x4, offset = 0x4, fixed_abs, tag = 'smem constant byte address 0x4 - core index']
  #allocation1 [shape = 'u32[72,128]{1,0:T(1,128)}', space=vmem, size = 0x9000, scoped, tag = 'internal scratch']
  %s0 = inlined_call_operand.vmem [shape: bf16[8,512], index: 0, kind: input, shape index: {}]
  %s1 = inlined_call_operand.vmem [shape: bf16[512,256], index: 1, kind: input, shape index: {}]
  %s2 = inlined_call_operand.vmem [shape: bf16[256,256], index: 2, kind: input, shape index: {}]
  %s3 = inlined_call_operand.vmem [shape: f32[2,256], index: 3, kind: input, shape index: {}]
  %s4 = inlined_call_operand.vmem [shape: f32[8,256], index: 4, kind: output, shape index: {}]
  %s5 = sld [smem:[#allocation0]]
  $region26: #{bnneck_forward.1} parent=0
    _
  %s7 = ssub.s32 1, %s5
  %s8 = scalar_select 0, %s7, %s5
  // Predicated region
  $region2: #{bnneck_forward.1} parent=0 // pred_check
    _
  $region3: #{bnneck_forward.1} parent=0 // pred_check_branch
    %10 = sbr.rel (0) target = $region5
  $region4: #{bnneck_forward.1} parent=0 // pred_region
    _
  $region5: #{bnneck_forward.1} parent=0 // pred_fallthru
    _
  // Predicated region
  $region6: #{bnneck_forward.1} parent=0 // pred_check
    _
  $region7: #{bnneck_forward.1} parent=0 // pred_check_branch
    %12 = sbr.rel (0) target = $region9
  $region8: #{bnneck_forward.1} parent=0 // pred_region
    _
  $region9: #{bnneck_forward.1} parent=0 // pred_fallthru
    _
  // Predicated region
  $region10: #{bnneck_forward.1} parent=0 // pred_check
    _
  $region11: #{bnneck_forward.1} parent=0 // pred_check_branch
    %14 = sbr.rel (0) target = $region13
  $region12: #{bnneck_forward.1} parent=0 // pred_region
    _
  $region13: #{bnneck_forward.1} parent=0 // pred_fallthru
    _
  // Predicated region
  $region14: #{bnneck_forward.1} parent=0 // pred_check
    _
  $region15: #{bnneck_forward.1} parent=0 // pred_check_branch
    %16 = sbr.rel (0) target = $region17
  $region16: #{bnneck_forward.1} parent=0 // pred_region
    _
  $region17: #{bnneck_forward.1} parent=0 // pred_fallthru
    _
  %v17 = vld [vmem:[%s0] sm:$0xff]
  %v18 = vld [vmem:[%s0 + $0x8] sm:$0xff]
  %v19 = vld [vmem:[%s3] sm:$0xf]
  %v20 = vld [vmem:[%s1] sm:$0xff]
  %v21 = vld [vmem:[%s1 + $0x8] sm:$0xff]
  %v22 = vld [vmem:[%s1 + $0x10] sm:$0xff]
  %v23 = vld [vmem:[%s1 + $0x18] sm:$0xff]
  %v24 = vld [vmem:[%s1 + $0x20] sm:$0xff]
  %v25 = vld [vmem:[%s1 + $0x28] sm:$0xff]
  %v26 = vld [vmem:[%s1 + $0x30] sm:$0xff]
  %v27 = vld [vmem:[%s1 + $0x38] sm:$0xff]
  %v28 = vld [vmem:[%s1 + $0x40] sm:$0xff]
  %v29 = vld [vmem:[%s1 + $0x48] sm:$0xff]
  %v30 = vld [vmem:[%s1 + $0x50] sm:$0xff]
  %v31 = vld [vmem:[%s1 + $0x58] sm:$0xff]
  %v32 = vld [vmem:[%s1 + $0x60] sm:$0xff]
  %v33 = vld [vmem:[%s1 + $0x68] sm:$0xff]
  %v34 = vld [vmem:[%s1 + $0x70] sm:$0xff]
  %v35 = vld [vmem:[%s1 + $0x78] sm:$0xff]
  %v36 = vld [vmem:[%s1 + $0x80] sm:$0xff]
  %v37 = vld [vmem:[%s1 + $0x88] sm:$0xff]
  %v38 = vld [vmem:[%s1 + $0x90] sm:$0xff]
  %v39 = vld [vmem:[%s1 + $0x98] sm:$0xff]
  %v40 = vld [vmem:[%s1 + $0xa0] sm:$0xff]
  %v41 = vld [vmem:[%s1 + $0xa8] sm:$0xff]
  %v42 = vld [vmem:[%s1 + $0xb0] sm:$0xff]
  %v43 = vld [vmem:[%s1 + $0xb8] sm:$0xff]
  %v44 = vld [vmem:[%s1 + $0xc0] sm:$0xff]
  %v45 = vld [vmem:[%s1 + $0xc8] sm:$0xff]
  %v46 = vld [vmem:[%s1 + $0xd0] sm:$0xff]
  %v47 = vld [vmem:[%s1 + $0xd8] sm:$0xff]
  %v48 = vld [vmem:[%s1 + $0xe0] sm:$0xff]
  %v49 = vld [vmem:[%s1 + $0xe8] sm:$0xff]
  %v50 = vld [vmem:[%s1 + $0xf0] sm:$0xff]
  %v51 = vld [vmem:[%s1 + $0xf8] sm:$0xff]
  %v52 = vld [vmem:[%s1 + $0x100] sm:$0xff]
  %v53 = vld [vmem:[%s1 + $0x108] sm:$0xff]
  %v54 = vld [vmem:[%s1 + $0x110] sm:$0xff]
  %v55 = vld [vmem:[%s1 + $0x118] sm:$0xff]
  %v56 = vld [vmem:[%s1 + $0x120] sm:$0xff]
  %v57 = vld [vmem:[%s1 + $0x128] sm:$0xff]
  %v58 = vld [vmem:[%s1 + $0x130] sm:$0xff]
  %v59 = vld [vmem:[%s1 + $0x138] sm:$0xff]
  %v60 = vld [vmem:[%s1 + $0x140] sm:$0xff]
  %v61 = vld [vmem:[%s1 + $0x148] sm:$0xff]
  %v62 = vld [vmem:[%s1 + $0x150] sm:$0xff]
  %v63 = vld [vmem:[%s1 + $0x158] sm:$0xff]
  %v64 = vld [vmem:[%s1 + $0x160] sm:$0xff]
  %v65 = vld [vmem:[%s1 + $0x168] sm:$0xff]
  %v66 = vld [vmem:[%s1 + $0x170] sm:$0xff]
  %v67 = vld [vmem:[%s1 + $0x178] sm:$0xff]
  %v68 = vld [vmem:[%s1 + $0x180] sm:$0xff]
  %v69 = vld [vmem:[%s1 + $0x188] sm:$0xff]
  %v70 = vld [vmem:[%s1 + $0x190] sm:$0xff]
  %v71 = vld [vmem:[%s1 + $0x198] sm:$0xff]
  %v72 = vld [vmem:[%s1 + $0x1a0] sm:$0xff]
  %v73 = vld [vmem:[%s1 + $0x1a8] sm:$0xff]
  %v74 = vld [vmem:[%s1 + $0x1b0] sm:$0xff]
  %v75 = vld [vmem:[%s1 + $0x1b8] sm:$0xff]
  %v76 = vld [vmem:[%s1 + $0x1c0] sm:$0xff]
  %v77 = vld [vmem:[%s1 + $0x1c8] sm:$0xff]
  %v78 = vld [vmem:[%s1 + $0x1d0] sm:$0xff]
  %v79 = vld [vmem:[%s1 + $0x1d8] sm:$0xff]
  %v80 = vld [vmem:[%s1 + $0x1e0] sm:$0xff]
  %v81 = vld [vmem:[%s1 + $0x1e8] sm:$0xff]
  %v82 = vld [vmem:[%s1 + $0x1f0] sm:$0xff]
  %v83 = vld [vmem:[%s1 + $0x1f8] sm:$0xff]
  %v85 = vperm.slane %v19, 0
  %v86 = vperm.slane %v19, 2
  %v89 = vperm.slane %v85, 0
  %v90 = vperm.slane %v86, 0
  %v93 = vunpack.c.l.b16 %v17
  %v94 = vunpack.c.h.b16 %v17
  %v95 = vunpack.c.l.b16 %v18
  %v96 = vunpack.c.h.b16 %v18
  %v97 = vpack.c.b16 %v93, %v93
  %v98 = vpack.c.b16 %v94, %v94
  %v99 = vpack.c.b16 %v95, %v95
  %v100 = vpack.c.b16 %v96, %v96
  %v169 = vunpack.c.l.b16 %v20
  %v170 = vunpack.c.h.b16 %v20
  %v171 = vunpack.c.l.b16 %v21
  %v172 = vunpack.c.h.b16 %v21
  %v173 = vunpack.c.l.b16 %v22
  %v174 = vunpack.c.h.b16 %v22
  %v175 = vunpack.c.l.b16 %v23
  %v176 = vunpack.c.h.b16 %v23
  %v177 = vunpack.c.l.b16 %v24
  %v178 = vunpack.c.h.b16 %v24
  %v179 = vunpack.c.l.b16 %v25
  %v180 = vunpack.c.h.b16 %v25
  %v181 = vunpack.c.l.b16 %v26
  %v182 = vunpack.c.h.b16 %v26
  %v183 = vunpack.c.l.b16 %v27
  %v184 = vunpack.c.h.b16 %v27
  %v185 = vunpack.c.l.b16 %v28
  %v186 = vunpack.c.h.b16 %v28
  %v187 = vunpack.c.l.b16 %v29
  %v188 = vunpack.c.h.b16 %v29
  %v189 = vunpack.c.l.b16 %v30
  %v190 = vunpack.c.h.b16 %v30
  %v191 = vunpack.c.l.b16 %v31
  %v192 = vunpack.c.h.b16 %v31
  %v193 = vunpack.c.l.b16 %v32
  %v194 = vunpack.c.h.b16 %v32
  %v195 = vunpack.c.l.b16 %v33
  %v196 = vunpack.c.h.b16 %v33
  %v197 = vunpack.c.l.b16 %v34
  %v198 = vunpack.c.h.b16 %v34
  %v199 = vunpack.c.l.b16 %v35
  %v200 = vunpack.c.h.b16 %v35
  %v201 = vunpack.c.l.b16 %v36
  %v202 = vunpack.c.h.b16 %v36
  %v203 = vunpack.c.l.b16 %v37
  %v204 = vunpack.c.h.b16 %v37
  %v205 = vunpack.c.l.b16 %v38
  %v206 = vunpack.c.h.b16 %v38
  %v207 = vunpack.c.l.b16 %v39
  %v208 = vunpack.c.h.b16 %v39
  %v209 = vunpack.c.l.b16 %v40
  %v210 = vunpack.c.h.b16 %v40
  %v211 = vunpack.c.l.b16 %v41
  %v212 = vunpack.c.h.b16 %v41
  %v213 = vunpack.c.l.b16 %v42
  %v214 = vunpack.c.h.b16 %v42
  %v215 = vunpack.c.l.b16 %v43
  %v216 = vunpack.c.h.b16 %v43
  %v217 = vunpack.c.l.b16 %v44
  %v218 = vunpack.c.h.b16 %v44
  %v219 = vunpack.c.l.b16 %v45
  %v220 = vunpack.c.h.b16 %v45
  %v221 = vunpack.c.l.b16 %v46
  %v222 = vunpack.c.h.b16 %v46
  %v223 = vunpack.c.l.b16 %v47
  %v224 = vunpack.c.h.b16 %v47
  %v225 = vunpack.c.l.b16 %v48
  %v226 = vunpack.c.h.b16 %v48
  %v227 = vunpack.c.l.b16 %v49
  %v228 = vunpack.c.h.b16 %v49
  %v229 = vunpack.c.l.b16 %v50
  %v230 = vunpack.c.h.b16 %v50
  %v231 = vunpack.c.l.b16 %v51
  %v232 = vunpack.c.h.b16 %v51
  %v233 = vunpack.c.l.b16 %v52
  %v234 = vunpack.c.h.b16 %v52
  %v235 = vunpack.c.l.b16 %v53
  %v236 = vunpack.c.h.b16 %v53
  %v237 = vunpack.c.l.b16 %v54
  %v238 = vunpack.c.h.b16 %v54
  %v239 = vunpack.c.l.b16 %v55
  %v240 = vunpack.c.h.b16 %v55
  %v241 = vunpack.c.l.b16 %v56
  %v242 = vunpack.c.h.b16 %v56
  %v243 = vunpack.c.l.b16 %v57
  %v244 = vunpack.c.h.b16 %v57
  %v245 = vunpack.c.l.b16 %v58
  %v246 = vunpack.c.h.b16 %v58
  %v247 = vunpack.c.l.b16 %v59
  %v248 = vunpack.c.h.b16 %v59
  %v249 = vunpack.c.l.b16 %v60
  %v250 = vunpack.c.h.b16 %v60
  %v251 = vunpack.c.l.b16 %v61
  %v252 = vunpack.c.h.b16 %v61
  %v253 = vunpack.c.l.b16 %v62
  %v254 = vunpack.c.h.b16 %v62
  %v255 = vunpack.c.l.b16 %v63
  %v256 = vunpack.c.h.b16 %v63
  %v257 = vunpack.c.l.b16 %v64
  %v258 = vunpack.c.h.b16 %v64
  %v259 = vunpack.c.l.b16 %v65
  %v260 = vunpack.c.h.b16 %v65
  %v261 = vunpack.c.l.b16 %v66
  %v262 = vunpack.c.h.b16 %v66
  %v263 = vunpack.c.l.b16 %v67
  %v264 = vunpack.c.h.b16 %v67
  %v265 = vunpack.c.l.b16 %v68
  %v266 = vunpack.c.h.b16 %v68
  %v267 = vunpack.c.l.b16 %v69
  %v268 = vunpack.c.h.b16 %v69
  %v269 = vunpack.c.l.b16 %v70
  %v270 = vunpack.c.h.b16 %v70
  %v271 = vunpack.c.l.b16 %v71
  %v272 = vunpack.c.h.b16 %v71
  %v273 = vunpack.c.l.b16 %v72
  %v274 = vunpack.c.h.b16 %v72
  %v275 = vunpack.c.l.b16 %v73
  %v276 = vunpack.c.h.b16 %v73
  %v277 = vunpack.c.l.b16 %v74
  %v278 = vunpack.c.h.b16 %v74
  %v279 = vunpack.c.l.b16 %v75
  %v280 = vunpack.c.h.b16 %v75
  %v281 = vunpack.c.l.b16 %v76
  %v282 = vunpack.c.h.b16 %v76
  %v283 = vunpack.c.l.b16 %v77
  %v284 = vunpack.c.h.b16 %v77
  %v285 = vunpack.c.l.b16 %v78
  %v286 = vunpack.c.h.b16 %v78
  %v287 = vunpack.c.l.b16 %v79
  %v288 = vunpack.c.h.b16 %v79
  %v289 = vunpack.c.l.b16 %v80
  %v290 = vunpack.c.h.b16 %v80
  %v291 = vunpack.c.l.b16 %v81
  %v292 = vunpack.c.h.b16 %v81
  %v293 = vunpack.c.l.b16 %v82
  %v294 = vunpack.c.h.b16 %v82
  %v295 = vunpack.c.l.b16 %v83
  %v296 = vunpack.c.h.b16 %v83
  %v297 = vpack.c.b16 %v171, %v169
  %v298 = vpack.c.b16 %v172, %v170
  %v299 = vpack.c.b16 %v175, %v173
  %v300 = vpack.c.b16 %v176, %v174
  %v301 = vpack.c.b16 %v179, %v177
  %v302 = vpack.c.b16 %v180, %v178
  %v303 = vpack.c.b16 %v183, %v181
  %v304 = vpack.c.b16 %v184, %v182
  %v305 = vpack.c.b16 %v187, %v185
  %v306 = vpack.c.b16 %v188, %v186
  %v307 = vpack.c.b16 %v191, %v189
  %v308 = vpack.c.b16 %v192, %v190
  %v309 = vpack.c.b16 %v195, %v193
  %v310 = vpack.c.b16 %v196, %v194
  %v311 = vpack.c.b16 %v199, %v197
  %v312 = vpack.c.b16 %v200, %v198
  %v313 = vpack.c.b16 %v203, %v201
  %v314 = vpack.c.b16 %v204, %v202
  %v315 = vpack.c.b16 %v207, %v205
  %v316 = vpack.c.b16 %v208, %v206
  %v317 = vpack.c.b16 %v211, %v209
  %v318 = vpack.c.b16 %v212, %v210
  %v319 = vpack.c.b16 %v215, %v213
  %v320 = vpack.c.b16 %v216, %v214
  %v321 = vpack.c.b16 %v219, %v217
  %v322 = vpack.c.b16 %v220, %v218
  %v323 = vpack.c.b16 %v223, %v221
  %v324 = vpack.c.b16 %v224, %v222
  %v325 = vpack.c.b16 %v227, %v225
  %v326 = vpack.c.b16 %v228, %v226
  %v327 = vpack.c.b16 %v231, %v229
  %v328 = vpack.c.b16 %v232, %v230
  %v329 = vpack.c.b16 %v235, %v233
  %v330 = vpack.c.b16 %v236, %v234
  %v331 = vpack.c.b16 %v239, %v237
  %v332 = vpack.c.b16 %v240, %v238
  %v333 = vpack.c.b16 %v243, %v241
  %v334 = vpack.c.b16 %v244, %v242
  %v335 = vpack.c.b16 %v247, %v245
  %v336 = vpack.c.b16 %v248, %v246
  %v337 = vpack.c.b16 %v251, %v249
  %v338 = vpack.c.b16 %v252, %v250
  %v339 = vpack.c.b16 %v255, %v253
  %v340 = vpack.c.b16 %v256, %v254
  %v341 = vpack.c.b16 %v259, %v257
  %v342 = vpack.c.b16 %v260, %v258
  %v343 = vpack.c.b16 %v263, %v261
  %v344 = vpack.c.b16 %v264, %v262
  %v345 = vpack.c.b16 %v267, %v265
  %v346 = vpack.c.b16 %v268, %v266
  %v347 = vpack.c.b16 %v271, %v269
  %v348 = vpack.c.b16 %v272, %v270
  %v349 = vpack.c.b16 %v275, %v273
  %v350 = vpack.c.b16 %v276, %v274
  %v351 = vpack.c.b16 %v279, %v277
  %v352 = vpack.c.b16 %v280, %v278
  %v353 = vpack.c.b16 %v283, %v281
  %v354 = vpack.c.b16 %v284, %v282
  %v355 = vpack.c.b16 %v287, %v285
  %v356 = vpack.c.b16 %v288, %v286
  %v357 = vpack.c.b16 %v291, %v289
  %v358 = vpack.c.b16 %v292, %v290
  %v359 = vpack.c.b16 %v295, %v293
  %v360 = vpack.c.b16 %v296, %v294
  %425 = vmatpush.bf16.msra.mxu0 %v311
  %426 = vmatpush.bf16.msra.mxu0 %v309
  %427 = vmatpush.bf16.msra.mxu0 %v307
  %428 = vmatpush.bf16.msra.mxu0 %v305
  %429 = vmatpush.bf16.msra.mxu0 %v303
  %430 = vmatpush.bf16.msra.mxu0 %v301
  %431 = vmatpush.bf16.msra.mxu0 %v299
  %432 = vmatpush.bf16.msra.mxu0 %v297
  %433 = vmatmul.bf16.gmra.mxu0 %v97
  %v434 = vpop.f32.mrf.mxu0
  %v435 = vadd.f32 %v89, %v434
  %v436 = vpop.f32.mrf.mxu0
  %437 = vdwg.mxu0
  %438 = vmatpush.bf16.msra.mxu0 %v327
  %439 = vmatpush.bf16.msra.mxu0 %v325
  %440 = vmatpush.bf16.msra.mxu0 %v323
  %441 = vmatpush.bf16.msra.mxu0 %v321
  %442 = vmatpush.bf16.msra.mxu0 %v319
  %443 = vmatpush.bf16.msra.mxu0 %v317
  %444 = vmatpush.bf16.msra.mxu0 %v315
  %445 = vmatpush.bf16.msra.mxu0 %v313
  %446 = vmatmul.bf16.gmra.mxu0 %v98
  %v447 = vpop.f32.mrf.mxu0
  %v448 = vadd.f32 %v435, %v447
  %v449 = vpop.f32.mrf.mxu0
  %450 = vdwg.mxu0
  %451 = vmatpush.bf16.msra.mxu0 %v343
  %452 = vmatpush.bf16.msra.mxu0 %v341
  %453 = vmatpush.bf16.msra.mxu0 %v339
  %454 = vmatpush.bf16.msra.mxu0 %v337
  %455 = vmatpush.bf16.msra.mxu0 %v335
  %456 = vmatpush.bf16.msra.mxu0 %v333
  %457 = vmatpush.bf16.msra.mxu0 %v331
  %458 = vmatpush.bf16.msra.mxu0 %v329
  %459 = vmatmul.bf16.gmra.mxu0 %v99
  %v460 = vpop.f32.mrf.mxu0
  %v461 = vadd.f32 %v448, %v460
  %v462 = vpop.f32.mrf.mxu0
  %463 = vdwg.mxu0
  %464 = vmatpush.bf16.msra.mxu0 %v359
  %465 = vmatpush.bf16.msra.mxu0 %v357
  %466 = vmatpush.bf16.msra.mxu0 %v355
  %467 = vmatpush.bf16.msra.mxu0 %v353
  %468 = vmatpush.bf16.msra.mxu0 %v351
  %469 = vmatpush.bf16.msra.mxu0 %v349
  %470 = vmatpush.bf16.msra.mxu0 %v347
  %471 = vmatpush.bf16.msra.mxu0 %v345
  %472 = vmatmul.bf16.gmra.mxu0 %v100
  %v473 = vpop.f32.mrf.mxu0
  %v474 = vadd.f32 %v461, %v473
  %v475 = vpop.f32.mrf.mxu0
  %476 = vdwg.mxu0
  %477 = vmatpush.bf16.msra.mxu0 %v312
  %478 = vmatpush.bf16.msra.mxu0 %v310
  %479 = vmatpush.bf16.msra.mxu0 %v308
  %480 = vmatpush.bf16.msra.mxu0 %v306
  %481 = vmatpush.bf16.msra.mxu0 %v304
  %482 = vmatpush.bf16.msra.mxu0 %v302
  %483 = vmatpush.bf16.msra.mxu0 %v300
  %484 = vmatpush.bf16.msra.mxu0 %v298
  %485 = vmatmul.bf16.gmra.mxu0 %v97
  %v486 = vpop.f32.mrf.mxu0
  %v487 = vadd.f32 %v90, %v486
  %v488 = vpop.f32.mrf.mxu0
  %489 = vdwg.mxu0
  %490 = vmatpush.bf16.msra.mxu0 %v328
  %491 = vmatpush.bf16.msra.mxu0 %v326
  %492 = vmatpush.bf16.msra.mxu0 %v324
  %493 = vmatpush.bf16.msra.mxu0 %v322
  %494 = vmatpush.bf16.msra.mxu0 %v320
  %495 = vmatpush.bf16.msra.mxu0 %v318
  %496 = vmatpush.bf16.msra.mxu0 %v316
  %497 = vmatpush.bf16.msra.mxu0 %v314
  %498 = vmatmul.bf16.gmra.mxu0 %v98
  %v499 = vpop.f32.mrf.mxu0
  %v500 = vadd.f32 %v487, %v499
  %v501 = vpop.f32.mrf.mxu0
  %502 = vdwg.mxu0
  %503 = vmatpush.bf16.msra.mxu0 %v344
  %504 = vmatpush.bf16.msra.mxu0 %v342
  %505 = vmatpush.bf16.msra.mxu0 %v340
  %506 = vmatpush.bf16.msra.mxu0 %v338
  %507 = vmatpush.bf16.msra.mxu0 %v336
  %508 = vmatpush.bf16.msra.mxu0 %v334
  %509 = vmatpush.bf16.msra.mxu0 %v332
  %510 = vmatpush.bf16.msra.mxu0 %v330
  %511 = vmatmul.bf16.gmra.mxu0 %v99
  %v512 = vpop.f32.mrf.mxu0
  %v513 = vadd.f32 %v500, %v512
  %v514 = vpop.f32.mrf.mxu0
  %515 = vdwg.mxu0
  %516 = vmatpush.bf16.msra.mxu0 %v360
  %517 = vmatpush.bf16.msra.mxu0 %v358
  %518 = vmatpush.bf16.msra.mxu0 %v356
  %519 = vmatpush.bf16.msra.mxu0 %v354
  %520 = vmatpush.bf16.msra.mxu0 %v352
  %521 = vmatpush.bf16.msra.mxu0 %v350
  %522 = vmatpush.bf16.msra.mxu0 %v348
  %523 = vmatpush.bf16.msra.mxu0 %v346
  %524 = vmatmul.bf16.gmra.mxu0 %v100
  %v525 = vpop.f32.mrf.mxu0
  %v526 = vadd.f32 %v513, %v525
  %v527 = vpop.f32.mrf.mxu0
  %528 = vdwg.mxu0
  %v529 = vmul.f32 %v474, %v474
  %v530 = vmul.f32 %v526, %v526
  %v531 = vadd.f32 %v529, %v530
  %532 = vadd.xlane.f32.xlu0 %v531
  %v533 = vpop.xlane.xlu0 %532
  %v534 = vmax.f32 %v533, 1e-24
  %v535 = vrsqrt.pop %v534
  %v536 = vmul.f32 %v535, %v534
  %v537 = vmul.f32 %v536, %v535
  %v538 = vmul.f32 0.5, %v537
  %v539 = vsub.f32 1.5, %v538
  %v540 = vmul.f32 %v535, %v539
  %vm541 = vweird.f32 %v534
  %vm542 = vweird.f32 %v535
  %vm543 = vmor %vm541, %vm542
  %v544 = vsel %vm543, %v535, %v540
  %v545 = vmul.f32 %v474, %v544
  %v546 = vmul.f32 %v526, %v544
  %v547 = vpack.c.bf16 %v545, %v545
  %v548 = vpack.c.bf16 %v546, %v546
  %v549 = vld [vmem:[%s2] sm:$0xff]
  %v550 = vld [vmem:[%s2 + $0x8] sm:$0xff]
  %v551 = vld [vmem:[%s2 + $0x10] sm:$0xff]
  %v552 = vld [vmem:[%s2 + $0x18] sm:$0xff]
  %v553 = vld [vmem:[%s2 + $0x20] sm:$0xff]
  %v554 = vld [vmem:[%s2 + $0x28] sm:$0xff]
  %v555 = vld [vmem:[%s2 + $0x30] sm:$0xff]
  %v556 = vld [vmem:[%s2 + $0x38] sm:$0xff]
  %v557 = vld [vmem:[%s2 + $0x40] sm:$0xff]
  %v558 = vld [vmem:[%s2 + $0x48] sm:$0xff]
  %v559 = vld [vmem:[%s2 + $0x50] sm:$0xff]
  %v560 = vld [vmem:[%s2 + $0x58] sm:$0xff]
  %v561 = vld [vmem:[%s2 + $0x60] sm:$0xff]
  %v562 = vld [vmem:[%s2 + $0x68] sm:$0xff]
  %v563 = vld [vmem:[%s2 + $0x70] sm:$0xff]
  %v564 = vld [vmem:[%s2 + $0x78] sm:$0xff]
  %v565 = vld [vmem:[%s2 + $0x80] sm:$0xff]
  %v566 = vld [vmem:[%s2 + $0x88] sm:$0xff]
  %v567 = vld [vmem:[%s2 + $0x90] sm:$0xff]
  %v568 = vld [vmem:[%s2 + $0x98] sm:$0xff]
  %v569 = vld [vmem:[%s2 + $0xa0] sm:$0xff]
  %v570 = vld [vmem:[%s2 + $0xa8] sm:$0xff]
  %v571 = vld [vmem:[%s2 + $0xb0] sm:$0xff]
  %v572 = vld [vmem:[%s2 + $0xb8] sm:$0xff]
  %v573 = vld [vmem:[%s2 + $0xc0] sm:$0xff]
  %v574 = vld [vmem:[%s2 + $0xc8] sm:$0xff]
  %v575 = vld [vmem:[%s2 + $0xd0] sm:$0xff]
  %v576 = vld [vmem:[%s2 + $0xd8] sm:$0xff]
  %v577 = vld [vmem:[%s2 + $0xe0] sm:$0xff]
  %v578 = vld [vmem:[%s2 + $0xe8] sm:$0xff]
  %v579 = vld [vmem:[%s2 + $0xf0] sm:$0xff]
  %v580 = vld [vmem:[%s2 + $0xf8] sm:$0xff]
  %v581 = vperm.slane %v19, 1
  %v582 = vperm.slane %v19, 3
  %v585 = vperm.slane %v581, 1
  %v586 = vperm.slane %v582, 1
  %v619 = vunpack.c.l.b16 %v549
  %v620 = vunpack.c.h.b16 %v549
  %v621 = vunpack.c.l.b16 %v550
  %v622 = vunpack.c.h.b16 %v550
  %v623 = vunpack.c.l.b16 %v551
  %v624 = vunpack.c.h.b16 %v551
  %v625 = vunpack.c.l.b16 %v552
  %v626 = vunpack.c.h.b16 %v552
  %v627 = vunpack.c.l.b16 %v553
  %v628 = vunpack.c.h.b16 %v553
  %v629 = vunpack.c.l.b16 %v554
  %v630 = vunpack.c.h.b16 %v554
  %v631 = vunpack.c.l.b16 %v555
  %v632 = vunpack.c.h.b16 %v555
  %v633 = vunpack.c.l.b16 %v556
  %v634 = vunpack.c.h.b16 %v556
  %v635 = vunpack.c.l.b16 %v557
  %v636 = vunpack.c.h.b16 %v557
  %v637 = vunpack.c.l.b16 %v558
  %v638 = vunpack.c.h.b16 %v558
  %v639 = vunpack.c.l.b16 %v559
  %v640 = vunpack.c.h.b16 %v559
  %v641 = vunpack.c.l.b16 %v560
  %v642 = vunpack.c.h.b16 %v560
  %v643 = vunpack.c.l.b16 %v561
  %v644 = vunpack.c.h.b16 %v561
  %v645 = vunpack.c.l.b16 %v562
  %v646 = vunpack.c.h.b16 %v562
  %v647 = vunpack.c.l.b16 %v563
  %v648 = vunpack.c.h.b16 %v563
  %v649 = vunpack.c.l.b16 %v564
  %v650 = vunpack.c.h.b16 %v564
  %v651 = vunpack.c.l.b16 %v565
  %v652 = vunpack.c.h.b16 %v565
  %v653 = vunpack.c.l.b16 %v566
  %v654 = vunpack.c.h.b16 %v566
  %v655 = vunpack.c.l.b16 %v567
  %v656 = vunpack.c.h.b16 %v567
  %v657 = vunpack.c.l.b16 %v568
  %v658 = vunpack.c.h.b16 %v568
  %v659 = vunpack.c.l.b16 %v569
  %v660 = vunpack.c.h.b16 %v569
  %v661 = vunpack.c.l.b16 %v570
  %v662 = vunpack.c.h.b16 %v570
  %v663 = vunpack.c.l.b16 %v571
  %v664 = vunpack.c.h.b16 %v571
  %v665 = vunpack.c.l.b16 %v572
  %v666 = vunpack.c.h.b16 %v572
  %v667 = vunpack.c.l.b16 %v573
  %v668 = vunpack.c.h.b16 %v573
  %v669 = vunpack.c.l.b16 %v574
  %v670 = vunpack.c.h.b16 %v574
  %v671 = vunpack.c.l.b16 %v575
  %v672 = vunpack.c.h.b16 %v575
  %v673 = vunpack.c.l.b16 %v576
  %v674 = vunpack.c.h.b16 %v576
  %v675 = vunpack.c.l.b16 %v577
  %v676 = vunpack.c.h.b16 %v577
  %v677 = vunpack.c.l.b16 %v578
  %v678 = vunpack.c.h.b16 %v578
  %v679 = vunpack.c.l.b16 %v579
  %v680 = vunpack.c.h.b16 %v579
  %v681 = vunpack.c.l.b16 %v580
  %v682 = vunpack.c.h.b16 %v580
  %v683 = vpack.c.b16 %v621, %v619
  %v684 = vpack.c.b16 %v622, %v620
  %v685 = vpack.c.b16 %v625, %v623
  %v686 = vpack.c.b16 %v626, %v624
  %v687 = vpack.c.b16 %v629, %v627
  %v688 = vpack.c.b16 %v630, %v628
  %v689 = vpack.c.b16 %v633, %v631
  %v690 = vpack.c.b16 %v634, %v632
  %v691 = vpack.c.b16 %v637, %v635
  %v692 = vpack.c.b16 %v638, %v636
  %v693 = vpack.c.b16 %v641, %v639
  %v694 = vpack.c.b16 %v642, %v640
  %v695 = vpack.c.b16 %v645, %v643
  %v696 = vpack.c.b16 %v646, %v644
  %v697 = vpack.c.b16 %v649, %v647
  %v698 = vpack.c.b16 %v650, %v648
  %v699 = vpack.c.b16 %v653, %v651
  %v700 = vpack.c.b16 %v654, %v652
  %v701 = vpack.c.b16 %v657, %v655
  %v702 = vpack.c.b16 %v658, %v656
  %v703 = vpack.c.b16 %v661, %v659
  %v704 = vpack.c.b16 %v662, %v660
  %v705 = vpack.c.b16 %v665, %v663
  %v706 = vpack.c.b16 %v666, %v664
  %v707 = vpack.c.b16 %v669, %v667
  %v708 = vpack.c.b16 %v670, %v668
  %v709 = vpack.c.b16 %v673, %v671
  %v710 = vpack.c.b16 %v674, %v672
  %v711 = vpack.c.b16 %v677, %v675
  %v712 = vpack.c.b16 %v678, %v676
  %v713 = vpack.c.b16 %v681, %v679
  %v714 = vpack.c.b16 %v682, %v680
  %747 = vmatpush.bf16.msra.mxu0 %v697
  %748 = vmatpush.bf16.msra.mxu0 %v695
  %749 = vmatpush.bf16.msra.mxu0 %v693
  %750 = vmatpush.bf16.msra.mxu0 %v691
  %751 = vmatpush.bf16.msra.mxu0 %v689
  %752 = vmatpush.bf16.msra.mxu0 %v687
  %753 = vmatpush.bf16.msra.mxu0 %v685
  %754 = vmatpush.bf16.msra.mxu0 %v683
  %755 = vmatmul.bf16.gmra.mxu0 %v547
  %v756 = vpop.f32.mrf.mxu0
  %v757 = vadd.f32 %v585, %v756
  %v758 = vpop.f32.mrf.mxu0
  %759 = vdwg.mxu0
  %760 = vmatpush.bf16.msra.mxu0 %v713
  %761 = vmatpush.bf16.msra.mxu0 %v711
  %762 = vmatpush.bf16.msra.mxu0 %v709
  %763 = vmatpush.bf16.msra.mxu0 %v707
  %764 = vmatpush.bf16.msra.mxu0 %v705
  %765 = vmatpush.bf16.msra.mxu0 %v703
  %766 = vmatpush.bf16.msra.mxu0 %v701
  %767 = vmatpush.bf16.msra.mxu0 %v699
  %768 = vmatmul.bf16.gmra.mxu0 %v548
  %v769 = vpop.f32.mrf.mxu0
  %v770 = vadd.f32 %v757, %v769
  %v771 = vpop.f32.mrf.mxu0
  %772 = vdwg.mxu0
  %773 = vmatpush.bf16.msra.mxu0 %v698
  %774 = vmatpush.bf16.msra.mxu0 %v696
  %775 = vmatpush.bf16.msra.mxu0 %v694
  %776 = vmatpush.bf16.msra.mxu0 %v692
  %777 = vmatpush.bf16.msra.mxu0 %v690
  %778 = vmatpush.bf16.msra.mxu0 %v688
  %779 = vmatpush.bf16.msra.mxu0 %v686
  %780 = vmatpush.bf16.msra.mxu0 %v684
  %781 = vmatmul.bf16.gmra.mxu0 %v547
  %v782 = vpop.f32.mrf.mxu0
  %v783 = vadd.f32 %v586, %v782
  %v784 = vpop.f32.mrf.mxu0
  %785 = vdwg.mxu0
  %786 = vmatpush.bf16.msra.mxu0 %v714
  %787 = vmatpush.bf16.msra.mxu0 %v712
  %788 = vmatpush.bf16.msra.mxu0 %v710
  %789 = vmatpush.bf16.msra.mxu0 %v708
  %790 = vmatpush.bf16.msra.mxu0 %v706
  %791 = vmatpush.bf16.msra.mxu0 %v704
  %792 = vmatpush.bf16.msra.mxu0 %v702
  %793 = vmatpush.bf16.msra.mxu0 %v700
  %794 = vmatmul.bf16.gmra.mxu0 %v548
  %v795 = vpop.f32.mrf.mxu0
  %v796 = vadd.f32 %v783, %v795
  %v797 = vpop.f32.mrf.mxu0
  %798 = vdwg.mxu0
  %799 = vst [vmem:[%s4] sm:$0xff] %v770
  %800 = vst [vmem:[%s4 + $0x8] sm:$0xff] %v796
  // Predicated region
  $region18: #{bnneck_forward.1} parent=0 // pred_check
    _
  $region19: #{bnneck_forward.1} parent=0 // pred_check_branch
    %802 = sbr.rel (0) target = $region21
  $region20: #{bnneck_forward.1} parent=0 // pred_region
    _
  $region21: #{bnneck_forward.1} parent=0 // pred_fallthru
    _
  // Predicated region
  $region22: #{bnneck_forward.1} parent=0 // pred_check
    _
  $region23: #{bnneck_forward.1} parent=0 // pred_check_branch
    %804 = sbr.rel (0) target = $region25
  $region24: #{bnneck_forward.1} parent=0 // pred_region
    _
  $region25: #{bnneck_forward.1} parent=0 // pred_fallthru
    _

</llo_original>
